<compile_context>
chip_gen: v6e
topology: v6e:2x2x1
jax: 0.10.0
libtpu: 0.0.40
codegen_flags: <defaults>
</compile_context>

<pallas_src>
import jax
import jax.numpy as jnp
from jax.experimental import pallas as pl
from jax.experimental.pallas import tpu as pltpu

IN_F, H1, H2, OUT_F = 6, 512, 756, 3
H2_PAD = 768       # 756 -> 768: multiple of 128 (fc2-N / fc3-K lane-dense)
OUT_PAD = 128      # 3   -> 128: lane-dense output stores (no masked vst)
MIN_TILE = 256     # multiple of 256 (v6e/v7x MXU rows) and 128 (v5e MXU rows)
MAX_TILE = 2048    # keeps fused working set well under v7x's 64 MiB VMEM


def mlp_kernel(x_ref, w12_ref, b12_ref, w3_ref, b3_ref, o_ref):
    # Fused fc1+fc2 (exact algebraic fold, no activation between them):
    #   h2_pre = (x @ w1 + b1) @ w2 + b2 = x @ (w1 @ w2) + (b1 @ w2 + b2)
    h2 = jnp.dot(x_ref[...], w12_ref[...],
                 preferred_element_type=jnp.float32) + b12_ref[...]
    h2 = jnp.maximum(h2, 0.0)
    # fc3 (no activation).  Padded rows of w3 (756..767) and padded output
    # columns (3..127) are zero, so padded lanes stay exactly zero.
    o_ref[...] = (jnp.dot(h2.astype(jnp.bfloat16), w3_ref[...],
                          preferred_element_type=jnp.float32)
                  + b3_ref[...]).astype(o_ref.dtype)


def _choose_tile(batch):
    """Pick a batch tile: multiple of 256, <= 2048, >=2 grid steps if possible."""
    b_pad = pl.cdiv(batch, MIN_TILE) * MIN_TILE
    tile = min(MAX_TILE, max(MIN_TILE, (b_pad // 2 // MIN_TILE) * MIN_TILE))
    b_pad = pl.cdiv(batch, tile) * tile
    return tile, b_pad


@jax.jit
def net_forward(x, kp):
    """x: (B, 6) float32.  kp: fused/padded/bf16 params from prepare_params."""
    B = x.shape[0]
    tile, B_pad = _choose_tile(B)
    x_p = jnp.zeros((B_pad, IN_F), jnp.bfloat16).at[:B].set(x.astype(jnp.bfloat16))

    w12, b12, w3, b3 = kp["w12"], kp["b12"], kp["w3"], kp["b3"]

    # Weights/biases: constant index_map -> DMA'd once, VMEM-resident while the
    # batch streams over the "parallel" grid axis.
    const2d = lambda a: pl.BlockSpec(a.shape, lambda i: (0, 0))
    grid = (B_pad // tile,)

    flops = 2 * B_pad * (IN_F * H2_PAD + H2_PAD * OUT_PAD)
    bytes_accessed = (x_p.size * 2
                      + (w12.size + w3.size) * 2
                      + (b12.size + b3.size) * 4
                      + B_pad * OUT_PAD * 4)

    out_padded = pl.pallas_call(
        mlp_kernel,
        out_shape=jax.ShapeDtypeStruct((B_pad, OUT_PAD), jnp.float32),
        grid=grid,
        in_specs=[
            pl.BlockSpec((tile, IN_F), lambda i: (i, 0)),   # x streams over batch
            const2d(w12), const2d(b12),
            const2d(w3), const2d(b3),
        ],
        out_specs=pl.BlockSpec((tile, OUT_PAD), lambda i: (i, 0)),
        compiler_params=pltpu.CompilerParams(
            dimension_semantics=("parallel",),
            vmem_limit_bytes=32 << 20,
        ),
        cost_estimate=pl.CostEstimate(
            flops=flops, transcendentals=0, bytes_accessed=bytes_accessed),
    )(x_p, w12, b12, w3, b3)

    return out_padded[:B, :OUT_F]


def init_params(key):
    """torch.nn.Linear-style init (U(-k, k), k = 1/sqrt(fan_in)), f32,
    weights stored pre-transposed as (in_features, out_features)."""
    ks = jax.random.split(key, 6)

    def lin(kw, kb, fan_in, fan_out):
        bound = 1.0 / jnp.sqrt(fan_in)
        w = jax.random.uniform(kw, (fan_in, fan_out), jnp.float32, -bound, bound)
        b = jax.random.uniform(kb, (1, fan_out), jnp.float32, -bound, bound)
        return w, b

    w1, b1 = lin(ks[0], ks[1], IN_F, H1)
    w2, b2 = lin(ks[2], ks[3], H1, H2)
    w3, b3 = lin(ks[4], ks[5], H2, OUT_F)
    return {"w1": w1, "b1": b1, "w2": w2, "b2": b2, "w3": w3, "b3": b3}


def prepare_params(p):
    """Fold fc1 into fc2 in f32, zero-pad 756->768 and 3->128, cast weights to
    bf16 (biases stay f32)."""
    w12 = p["w1"] @ p["w2"]               # (6, 756), f32
    b12 = p["b1"] @ p["w2"] + p["b2"]     # (1, 756), f32
    w12_p = jnp.zeros((IN_F, H2_PAD), jnp.float32).at[:, :H2].set(w12)
    b12_p = jnp.zeros((1, H2_PAD), jnp.float32).at[:, :H2].set(b12)
    w3_p = jnp.zeros((H2_PAD, OUT_PAD), jnp.float32).at[:H2, :OUT_F].set(p["w3"])
    b3_p = jnp.zeros((1, OUT_PAD), jnp.float32).at[:, :OUT_F].set(p["b3"])
    return {
        "w12": w12_p.astype(jnp.bfloat16), "b12": b12_p,
        "w3": w3_p.astype(jnp.bfloat16),   "b3": b3_p,
    }


def net_forward_ref_f32(x, p):
    """Exact f32 reference of the original torch module (unfused, 3 layers)."""
    h1 = x @ p["w1"] + p["b1"]
    h2 = jnp.maximum(h1 @ p["w2"] + p["b2"], 0.0)
    return h2 @ p["w3"] + p["b3"]


def net_forward_ref_bf16(x, kp):
    """Reference matching the kernel numerics (fused bf16 operands, f32 acc)."""
    h2 = jnp.dot(x.astype(jnp.bfloat16), kp["w12"],
                 preferred_element_type=jnp.float32) + kp["b12"]
    h2 = jnp.maximum(h2, 0.0)
    out = jnp.dot(h2.astype(jnp.bfloat16), kp["w3"],
                  preferred_element_type=jnp.float32) + kp["b3"]
    return out[:, :OUT_F]


def _check(x, params, kparams):
    out = jax.block_until_ready(net_forward(x, kparams))
    assert out.shape == (x.shape[0], OUT_F)
    # 1) Bit-level sanity vs. a reference with identical bf16/f32 numerics.
    ref_bf16 = net_forward_ref_bf16(x, kparams)
    assert jnp.allclose(out, ref_bf16, atol=2e-3, rtol=2e-3), \
        float(jnp.max(jnp.abs(out - ref_bf16)))
    # 2) Semantic check vs. the exact f32 (unfused) torch-equivalent forward.
    ref_f32 = net_forward_ref_f32(x, params)
    assert jnp.allclose(out, ref_f32, atol=1e-1, rtol=1e-1), \
        float(jnp.max(jnp.abs(out - ref_f32)))


if __name__ == "__main__":
    key = jax.random.PRNGKey(0)
    k_x1, k_x2, k_p = jax.random.split(key, 3)

    params = init_params(k_p)
    kparams = prepare_params(params)

    # Small batch (heavy zero-padding, single grid step).
    x_small = jax.random.normal(k_x1, (8, IN_F), jnp.float32)
    _check(x_small, params, kparams)

    # Larger batch, not a multiple of the tile: exercises padding + a
    # multi-step "parallel" grid (both TensorCores on v7x).
    x_multi = jax.random.normal(k_x2, (520, IN_F), jnp.float32)
    _check(x_multi, params, kparams)

    print("KERNEL_OK")
</pallas_src>

<mosaic_0001>
module attributes {stable_mosaic.version = 11 : i64} {
  func.func @mlp_kernel(%arg0: i32, %arg1: memref<256x6xbf16, #tpu.memory_space<vmem>>, %arg2: memref<6x768xbf16, #tpu.memory_space<vmem>>, %arg3: memref<1x768xf32, #tpu.memory_space<vmem>>, %arg4: memref<768x128xbf16, #tpu.memory_space<vmem>>, %arg5: memref<1x128xf32, #tpu.memory_space<vmem>>, %arg6: memref<256x128xf32, #tpu.memory_space<vmem>>) attributes {dimension_semantics = [#tpu.dimension_semantics<parallel>], iteration_bounds = array<i64: 1>, scalar_prefetch = 0 : i64, scratch_operands = 0 : i64, tpu.core_type = #tpu.core_type<tc>, window_params = [{transform_indices = @transform_0, window_bounds = array<i64: 256, 6>}, {pipeline_mode = #tpu.pipeline_mode<synchronous>, transform_indices = @transform_1, window_bounds = array<i64: 6, 768>}, {pipeline_mode = #tpu.pipeline_mode<synchronous>, transform_indices = @transform_2, window_bounds = array<i64: 1, 768>}, {pipeline_mode = #tpu.pipeline_mode<synchronous>, transform_indices = @transform_3, window_bounds = array<i64: 768, 128>}, {pipeline_mode = #tpu.pipeline_mode<synchronous>, transform_indices = @transform_4, window_bounds = array<i64: 1, 128>}, {transform_indices = @transform_5, window_bounds = array<i64: 256, 128>}]} {
    %c0 = arith.constant 0 : index
    %c0_0 = arith.constant 0 : index
    %0 = vector.load %arg1[%c0, %c0_0] : memref<256x6xbf16, #tpu.memory_space<vmem>>, vector<256x6xbf16>
    %c0_1 = arith.constant 0 : index
    %c0_2 = arith.constant 0 : index
    %1 = vector.load %arg2[%c0_1, %c0_2] : memref<6x768xbf16, #tpu.memory_space<vmem>>, vector<6x768xbf16>
    %cst = arith.constant dense<0.000000e+00> : vector<256x768xf32>
    %2 = tpu.matmul %0, %1, %cst {dimension_numbers = #tpu.dot_dimension_numbers<[1], [0], [0], [1], [0, 0, 1, 1], [], []>} : vector<256x6xbf16>, vector<6x768xbf16>, vector<256x768xf32> -> vector<256x768xf32>
    %c0_3 = arith.constant 0 : index
    %c0_4 = arith.constant 0 : index
    %3 = vector.load %arg3[%c0_3, %c0_4] : memref<1x768xf32, #tpu.memory_space<vmem>>, vector<1x768xf32>
    %4 = vector.broadcast %3 : vector<1x768xf32> to vector<256x768xf32>
    %5 = arith.addf %2, %4 : vector<256x768xf32>
    %cst_5 = arith.constant 0.000000e+00 : f32
    %6 = vector.broadcast %cst_5 : f32 to vector<256x768xf32>
    %7 = arith.maximumf %5, %6 : vector<256x768xf32>
    %8 = arith.truncf %7 : vector<256x768xf32> to vector<256x768xbf16>
    %c0_6 = arith.constant 0 : index
    %c0_7 = arith.constant 0 : index
    %9 = vector.load %arg4[%c0_6, %c0_7] : memref<768x128xbf16, #tpu.memory_space<vmem>>, vector<768x128xbf16>
    %cst_8 = arith.constant dense<0.000000e+00> : vector<256x128xf32>
    %10 = tpu.matmul %8, %9, %cst_8 {dimension_numbers = #tpu.dot_dimension_numbers<[1], [0], [0], [1], [0, 0, 1, 1], [], []>} : vector<256x768xbf16>, vector<768x128xbf16>, vector<256x128xf32> -> vector<256x128xf32>
    %c0_9 = arith.constant 0 : index
    %c0_10 = arith.constant 0 : index
    %11 = vector.load %arg5[%c0_9, %c0_10] : memref<1x128xf32, #tpu.memory_space<vmem>>, vector<1x128xf32>
    %12 = vector.broadcast %11 : vector<1x128xf32> to vector<256x128xf32>
    %13 = arith.addf %10, %12 : vector<256x128xf32>
    %c0_11 = arith.constant 0 : index
    %c0_12 = arith.constant 0 : index
    %14 = vector.load %arg6[%c0_11, %c0_12] : memref<256x128xf32, #tpu.memory_space<vmem>>, vector<256x128xf32>
    tpu.vector_store %arg6[%c0_11, %c0_12], %13 {strides = array<i32>} : memref<256x128xf32, #tpu.memory_space<vmem>>, vector<256x128xf32>,
    return
  }
  func.func @transform_0(%arg0: i32) -> (i32, i32) {
    %c0_i32 = arith.constant 0 : i32
    %c0_i32_0 = arith.constant 0 : i32
    return %arg0, %c0_i32 : i32, i32
  }
  func.func @transform_1(%arg0: i32) -> (i32, i32) {
    %c0_i32 = arith.constant 0 : i32
    %c0_i32_0 = arith.constant 0 : i32
    %c0_i32_1 = arith.constant 0 : i32
    return %c0_i32, %c0_i32_0 : i32, i32
  }
  func.func @transform_2(%arg0: i32) -> (i32, i32) {
    %c0_i32 = arith.constant 0 : i32
    %c0_i32_0 = arith.constant 0 : i32
    %c0_i32_1 = arith.constant 0 : i32
    return %c0_i32, %c0_i32_0 : i32, i32
  }
  func.func @transform_3(%arg0: i32) -> (i32, i32) {
    %c0_i32 = arith.constant 0 : i32
    %c0_i32_0 = arith.constant 0 : i32
    %c0_i32_1 = arith.constant 0 : i32
    return %c0_i32, %c0_i32_0 : i32, i32
  }
  func.func @transform_4(%arg0: i32) -> (i32, i32) {
    %c0_i32 = arith.constant 0 : i32
    %c0_i32_0 = arith.constant 0 : i32
    %c0_i32_1 = arith.constant 0 : i32
    return %c0_i32, %c0_i32_0 : i32, i32
  }
  func.func @transform_5(%arg0: i32) -> (i32, i32) {
    %c0_i32 = arith.constant 0 : i32
    %c0_i32_0 = arith.constant 0 : i32
    return %arg0, %c0_i32 : i32, i32
  }
}

</mosaic_0001>

<llo_original>
// kernel: net_forward.1
$region0: #{net_forward.1}
  #allocation0 [shape = 'u32[]', space=smem, size = 0x4, offset = 0x4, fixed_abs, tag = 'smem constant byte address 0x4 - core index']
  #allocation1 [shape = 'u32[144,128]{1,0:T(1,128)}', space=vmem, size = 0x12000, scoped, tag = 'internal scratch']
  %s0 = inlined_call_operand.vmem [shape: bf16[256,6], index: 0, kind: input, shape index: {}]
  %s1 = inlined_call_operand.vmem [shape: bf16[6,768], index: 1, kind: input, shape index: {}]
  %s2 = inlined_call_operand.vmem [shape: f32[1,768], index: 2, kind: input, shape index: {}]
  %s3 = inlined_call_operand.hbm [shape: bf16[768,128], index: 3, kind: input, shape index: {}]
  %s4 = inlined_call_operand.vmem [shape: f32[1,128], index: 4, kind: input, shape index: {}]
  %s5 = inlined_call_operand.vmem [shape: f32[256,128], index: 5, kind: output, shape index: {}]
  %s6 = sld [smem:[#allocation0]]
  $region34: #{net_forward.1} parent=0
    _
  %s8 = ssub.s32 1, %s6
  %s9 = scalar_select 0, %s8, %s6
  $region1: #{net_forward.1} parent=0
    #allocation2 [shape = 'u8[196608]{0}', space=vmem, size = 0x30000, scoped, tag = 'input window, operand 3, single buffered']
    #allocation3 [shape = 's32[1]{0}', space=sflag, size = 0x4, scoped, tag = 'scoped memory for net_forward.1']
    %10 = vsyncpa [#allocation3], 0
    // Predicated region
    $region2: #{net_forward.1} parent=1 // pred_check
      _
    $region3: #{net_forward.1} parent=1 // pred_check_branch
      %12 = sbr.rel (0) target = $region5
    $region4: #{net_forward.1} parent=1 // pred_region
      _
    $region5: #{net_forward.1} parent=1 // pred_fallthru
      _
    // Predicated region
    $region6: #{net_forward.1} parent=1 // pred_check
      _
    $region7: #{net_forward.1} parent=1 // pred_check_branch
      %14 = sbr.rel (0) target = $region9
    $region8: #{net_forward.1} parent=1 // pred_region
      _
    $region9: #{net_forward.1} parent=1 // pred_fallthru
      _
    // Predicated region
    $region10: #{net_forward.1} parent=1 // pred_check
      _
    $region11: #{net_forward.1} parent=1 // pred_check_branch
      %16 = sbr.rel (0) target = $region13
    $region12: #{net_forward.1} parent=1 // pred_region
      _
    $region13: #{net_forward.1} parent=1 // pred_fallthru
      _
    // Predicated region
    $region14: #{net_forward.1} parent=1 // pred_check
      _
    $region15: #{net_forward.1} parent=1 // pred_check_branch
      %18 = sbr.rel (0) target = $region17
    $region16: #{net_forward.1} parent=1 // pred_region
      %s20 = ssub.s32 6144, 6144
      %21 = vsyncadd [#allocation3], %s20
      %s22 = sshll.u32 [#allocation2], 4
      %s23 = int_to_ptr.vmem [resolvable:$true] %s22
      %28 = dma.hbm_to_vmem [thread:$0]  %s3, 6144, %s23, [#allocation3], 64, 64, 4
    $region17: #{net_forward.1} parent=1 // pred_fallthru
      _
    // Predicated region
    $region18: #{net_forward.1} parent=1 // pred_check
      _
    $region19: #{net_forward.1} parent=1 // pred_check_branch
      %30 = sbr.rel (0) target = $region21
    $region20: #{net_forward.1} parent=1 // pred_region
      _
    $region21: #{net_forward.1} parent=1 // pred_fallthru
      _
    // Predicated region
    $region22: #{net_forward.1} parent=1 // pred_check
      _
    $region23: #{net_forward.1} parent=1 // pred_check_branch
      %32 = sbr.rel (0) target = $region25
    $region24: #{net_forward.1} parent=1 // pred_region
      %33 = dma.done [#allocation3], 6144
    $region25: #{net_forward.1} parent=1 // pred_fallthru
      _
    %v35 = vld [vmem:[%s0] sm:$0xf]
    %v36 = vld [vmem:[%s0 + $0x4] sm:$0xf]
    %v37 = vld [vmem:[%s0 + $0x8] sm:$0xf]
    %v38 = vld [vmem:[%s0 + $0xc] sm:$0xf]
    %v39 = vld [vmem:[%s0 + $0x10] sm:$0xf]
    %v40 = vld [vmem:[%s0 + $0x14] sm:$0xf]
    %v41 = vld [vmem:[%s0 + $0x18] sm:$0xf]
    %v42 = vld [vmem:[%s0 + $0x1c] sm:$0xf]
    %v43 = vld [vmem:[%s0 + $0x20] sm:$0xf]
    %v44 = vld [vmem:[%s0 + $0x24] sm:$0xf]
    %v45 = vld [vmem:[%s0 + $0x28] sm:$0xf]
    %v46 = vld [vmem:[%s0 + $0x2c] sm:$0xf]
    %v47 = vld [vmem:[%s0 + $0x30] sm:$0xf]
    %v48 = vld [vmem:[%s0 + $0x34] sm:$0xf]
    %v49 = vld [vmem:[%s0 + $0x38] sm:$0xf]
    %v50 = vld [vmem:[%s0 + $0x3c] sm:$0xf]
    %v51 = vld [vmem:[%s0 + $0x40] sm:$0xf]
    %v52 = vld [vmem:[%s0 + $0x44] sm:$0xf]
    %v53 = vld [vmem:[%s0 + $0x48] sm:$0xf]
    %v54 = vld [vmem:[%s0 + $0x4c] sm:$0xf]
    %v55 = vld [vmem:[%s0 + $0x50] sm:$0xf]
    %v56 = vld [vmem:[%s0 + $0x54] sm:$0xf]
    %v57 = vld [vmem:[%s0 + $0x58] sm:$0xf]
    %v58 = vld [vmem:[%s0 + $0x5c] sm:$0xf]
    %v59 = vld [vmem:[%s0 + $0x60] sm:$0xf]
    %v60 = vld [vmem:[%s0 + $0x64] sm:$0xf]
    %v61 = vld [vmem:[%s0 + $0x68] sm:$0xf]
    %v62 = vld [vmem:[%s0 + $0x6c] sm:$0xf]
    %v63 = vld [vmem:[%s0 + $0x70] sm:$0xf]
    %v64 = vld [vmem:[%s0 + $0x74] sm:$0xf]
    %v65 = vld [vmem:[%s0 + $0x78] sm:$0xf]
    %v66 = vld [vmem:[%s0 + $0x7c] sm:$0xf]
    %v67 = vld [vmem:[%s1] sm:$0x77]
    %v68 = vld [vmem:[%s1 + $0x8] sm:$0x77]
    %v69 = vld [vmem:[%s1 + $0x10] sm:$0x77]
    %v70 = vld [vmem:[%s2] sm:$0x3f]
    %v72 = vlaneseq
    %v73 = vshrl.u32 %v72, 7
    %v74 = vsub.s32 0, %v73
    %v75 = vrot.slane %v70, %v74
    %v76 = vlaneseq
    %v77 = vshrl.u32 %v76, 7
    %v78 = vsub.s32 1, %v77
    %v79 = vrot.slane %v70, %v78
    %v80 = vlaneseq
    %v81 = vshrl.u32 %v80, 7
    %v82 = vsub.s32 2, %v81
    %v83 = vrot.slane %v70, %v82
    %v84 = vlaneseq
    %v85 = vshrl.u32 %v84, 7
    %v86 = vsub.s32 3, %v85
    %v87 = vrot.slane %v70, %v86
    %v88 = vlaneseq
    %v89 = vshrl.u32 %v88, 7
    %v90 = vsub.s32 4, %v89
    %v91 = vrot.slane %v70, %v90
    %v92 = vlaneseq
    %v93 = vshrl.u32 %v92, 7
    %v94 = vsub.s32 5, %v93
    %v95 = vrot.slane %v70, %v94
    %v134 = vunpack.c.l.b16 %v35
    %v135 = vunpack.c.l.b16 %v36
    %v136 = vunpack.c.l.b16 %v37
    %v137 = vunpack.c.l.b16 %v38
    %v138 = vunpack.c.l.b16 %v39
    %v139 = vunpack.c.l.b16 %v40
    %v140 = vunpack.c.l.b16 %v41
    %v141 = vunpack.c.l.b16 %v42
    %v142 = vunpack.c.l.b16 %v43
    %v143 = vunpack.c.l.b16 %v44
    %v144 = vunpack.c.l.b16 %v45
    %v145 = vunpack.c.l.b16 %v46
    %v146 = vunpack.c.l.b16 %v47
    %v147 = vunpack.c.l.b16 %v48
    %v148 = vunpack.c.l.b16 %v49
    %v149 = vunpack.c.l.b16 %v50
    %v150 = vunpack.c.l.b16 %v51
    %v151 = vunpack.c.l.b16 %v52
    %v152 = vunpack.c.l.b16 %v53
    %v153 = vunpack.c.l.b16 %v54
    %v154 = vunpack.c.l.b16 %v55
    %v155 = vunpack.c.l.b16 %v56
    %v156 = vunpack.c.l.b16 %v57
    %v157 = vunpack.c.l.b16 %v58
    %v158 = vunpack.c.l.b16 %v59
    %v159 = vunpack.c.l.b16 %v60
    %v160 = vunpack.c.l.b16 %v61
    %v161 = vunpack.c.l.b16 %v62
    %v162 = vunpack.c.l.b16 %v63
    %v163 = vunpack.c.l.b16 %v64
    %v164 = vunpack.c.l.b16 %v65
    %v165 = vunpack.c.l.b16 %v66
    %v166 = vpack.c.b16 %v135, %v134
    %v167 = vpack.c.b16 %v137, %v136
    %v168 = vpack.c.b16 %v139, %v138
    %v169 = vpack.c.b16 %v141, %v140
    %v170 = vpack.c.b16 %v143, %v142
    %v171 = vpack.c.b16 %v145, %v144
    %v172 = vpack.c.b16 %v147, %v146
    %v173 = vpack.c.b16 %v149, %v148
    %v174 = vpack.c.b16 %v151, %v150
    %v175 = vpack.c.b16 %v153, %v152
    %v176 = vpack.c.b16 %v155, %v154
    %v177 = vpack.c.b16 %v157, %v156
    %v178 = vpack.c.b16 %v159, %v158
    %v179 = vpack.c.b16 %v161, %v160
    %v180 = vpack.c.b16 %v163, %v162
    %v181 = vpack.c.b16 %v165, %v164
    %v185 = vunpack.c.l.b16 %v67
    %v186 = vunpack.c.h.b16 %v67
    %v187 = vunpack.c.l.b16 %v68
    %v188 = vunpack.c.h.b16 %v68
    %v189 = vunpack.c.l.b16 %v69
    %v190 = vunpack.c.h.b16 %v69
    %v191 = vpack.c.b16 %v185, %v185
    %v192 = vpack.c.b16 %v186, %v186
    %v193 = vpack.c.b16 %v187, %v187
    %v194 = vpack.c.b16 %v188, %v188
    %v195 = vpack.c.b16 %v189, %v189
    %v196 = vpack.c.b16 %v190, %v190
    %vm197 = vcmask 48128
    %v199 = vsel %vm197, %v166, 0
    %v202 = vsel %vm197, %v167, 0
    %v205 = vsel %vm197, %v168, 0
    %v208 = vsel %vm197, %v169, 0
    %v211 = vsel %vm197, %v170, 0
    %v214 = vsel %vm197, %v171, 0
    %v217 = vsel %vm197, %v172, 0
    %v220 = vsel %vm197, %v173, 0
    %v223 = vsel %vm197, %v174, 0
    %v226 = vsel %vm197, %v175, 0
    %v229 = vsel %vm197, %v176, 0
    %v232 = vsel %vm197, %v177, 0
    %v235 = vsel %vm197, %v178, 0
    %v238 = vsel %vm197, %v179, 0
    %v241 = vsel %vm197, %v180, 0
    %v244 = vsel %vm197, %v181, 0
    %vm246 = vcmask 1042432
    %v248 = vsel %vm246, %v191, 0
    %v251 = vsel %vm246, %v192, 0
    %v254 = vsel %vm246, %v193, 0
    %v257 = vsel %vm246, %v194, 0
    %v260 = vsel %vm246, %v195, 0
    %v263 = vsel %vm246, %v196, 0
    %265 = vmatprep.subr.bf16.mxu0 0
    %266 = vmatpush1.bf16.msra.mxu0 0
    %267 = vmatprep.subr.bf16.mxu0 0
    %268 = vmatpush1.bf16.msra.mxu0 0
    %269 = vmatprep.subr.bf16.mxu0 0
    %270 = vmatpush1.bf16.msra.mxu0 0
    %271 = vmatprep.subr.bf16.mxu0 0
    %272 = vmatpush1.bf16.msra.mxu0 0
    %273 = vmatprep.subr.bf16.mxu0 0
    %274 = vmatpush1.bf16.msra.mxu0 0
    %275 = vmatprep.subr.bf16.mxu0 0
    %276 = vmatpush1.bf16.msra.mxu0 0
    %277 = vmatprep.subr.bf16.mxu0 0
    %278 = vmatpush1.bf16.msra.mxu0 0
    %279 = vmatprep.subr.bf16.mxu0 %v251
    %280 = vmatpush1.bf16.msra.mxu0 %v248
    %281 = vmatprep.subr.bf16.mxu0 0
    %282 = vmatpush2.bf16.msra.mxu0 0
    %283 = vmatprep.subr.bf16.mxu0 0
    %284 = vmatpush2.bf16.msra.mxu0 0
    %285 = vmatprep.subr.bf16.mxu0 0
    %286 = vmatpush2.bf16.msra.mxu0 0
    %287 = vmatprep.subr.bf16.mxu0 0
    %288 = vmatpush2.bf16.msra.mxu0 0
    %289 = vmatprep.subr.bf16.mxu0 0
    %290 = vmatpush2.bf16.msra.mxu0 0
    %291 = vmatprep.subr.bf16.mxu0 0
    %292 = vmatpush2.bf16.msra.mxu0 0
    %293 = vmatprep.subr.bf16.mxu0 0
    %294 = vmatpush2.bf16.msra.mxu0 0
    %295 = vmatprep.subr.bf16.mxu0 0
    %296 = vmatpush2.bf16.msra.mxu0 0
    %297 = vmatprep.mubr.bf16.mxu0 0
    %298 = vmatmul.mubr.bf16.gmra.mxu0 %v199
    %v299 = vpop.f32.mrf.mxu0
    %v300 = vadd.f32 %v75, %v299
    %v301 = vpop.f32.mrf.mxu0
    %v302 = vadd.f32 %v79, %v301
    %v303 = vpop.f32.mrf.mxu0
    %v304 = vadd.f32 %v75, %v303
    %v305 = vpop.f32.mrf.mxu0
    %v306 = vadd.f32 %v79, %v305
    %307 = vmatprep.mubr.bf16.mxu0 0
    %308 = vmatmul.mubr.bf16.gmra.mxu0 %v202
    %v309 = vpop.f32.mrf.mxu0
    %v310 = vadd.f32 %v75, %v309
    %v311 = vpop.f32.mrf.mxu0
    %v312 = vadd.f32 %v79, %v311
    %v313 = vpop.f32.mrf.mxu0
    %v314 = vadd.f32 %v75, %v313
    %v315 = vpop.f32.mrf.mxu0
    %v316 = vadd.f32 %v79, %v315
    %317 = vmatprep.mubr.bf16.mxu0 0
    %318 = vmatmul.mubr.bf16.gmra.mxu0 %v205
    %v319 = vpop.f32.mrf.mxu0
    %v320 = vadd.f32 %v75, %v319
    %v321 = vpop.f32.mrf.mxu0
    %v322 = vadd.f32 %v79, %v321
    %v323 = vpop.f32.mrf.mxu0
    %v324 = vadd.f32 %v75, %v323
    %v325 = vpop.f32.mrf.mxu0
    %v326 = vadd.f32 %v79, %v325
    %327 = vmatprep.mubr.bf16.mxu0 0
    %328 = vmatmul.mubr.bf16.gmra.mxu0 %v208
    %v329 = vpop.f32.mrf.mxu0
    %v330 = vadd.f32 %v75, %v329
    %v331 = vpop.f32.mrf.mxu0
    %v332 = vadd.f32 %v79, %v331
    %v333 = vpop.f32.mrf.mxu0
    %v334 = vadd.f32 %v75, %v333
    %v335 = vpop.f32.mrf.mxu0
    %v336 = vadd.f32 %v79, %v335
    %337 = vmatprep.mubr.bf16.mxu0 0
    %338 = vmatmul.mubr.bf16.gmra.mxu0 %v211
    %v339 = vpop.f32.mrf.mxu0
    %v340 = vadd.f32 %v75, %v339
    %v341 = vpop.f32.mrf.mxu0
    %v342 = vadd.f32 %v79, %v341
    %v343 = vpop.f32.mrf.mxu0
    %v344 = vadd.f32 %v75, %v343
    %v345 = vpop.f32.mrf.mxu0
    %v346 = vadd.f32 %v79, %v345
    %347 = vmatprep.mubr.bf16.mxu0 0
    %348 = vmatmul.mubr.bf16.gmra.mxu0 %v214
    %v349 = vpop.f32.mrf.mxu0
    %v350 = vadd.f32 %v75, %v349
    %v351 = vpop.f32.mrf.mxu0
    %v352 = vadd.f32 %v79, %v351
    %v353 = vpop.f32.mrf.mxu0
    %v354 = vadd.f32 %v75, %v353
    %v355 = vpop.f32.mrf.mxu0
    %v356 = vadd.f32 %v79, %v355
    %357 = vmatprep.mubr.bf16.mxu0 0
    %358 = vmatmul.mubr.bf16.gmra.mxu0 %v217
    %v359 = vpop.f32.mrf.mxu0
    %v360 = vadd.f32 %v75, %v359
    %v361 = vpop.f32.mrf.mxu0
    %v362 = vadd.f32 %v79, %v361
    %v363 = vpop.f32.mrf.mxu0
    %v364 = vadd.f32 %v75, %v363
    %v365 = vpop.f32.mrf.mxu0
    %v366 = vadd.f32 %v79, %v365
    %367 = vmatprep.mubr.bf16.mxu0 0
    %368 = vmatmul.mubr.bf16.gmra.mxu0 %v220
    %v369 = vpop.f32.mrf.mxu0
    %v370 = vadd.f32 %v75, %v369
    %v371 = vpop.f32.mrf.mxu0
    %v372 = vadd.f32 %v79, %v371
    %v373 = vpop.f32.mrf.mxu0
    %v374 = vadd.f32 %v75, %v373
    %v375 = vpop.f32.mrf.mxu0
    %v376 = vadd.f32 %v79, %v375
    %377 = vmatprep.mubr.bf16.mxu0 0
    %378 = vmatmul.mubr.bf16.gmra.mxu0 %v223
    %v379 = vpop.f32.mrf.mxu0
    %v380 = vadd.f32 %v75, %v379
    %v381 = vpop.f32.mrf.mxu0
    %v382 = vadd.f32 %v79, %v381
    %v383 = vpop.f32.mrf.mxu0
    %v384 = vadd.f32 %v75, %v383
    %v385 = vpop.f32.mrf.mxu0
    %v386 = vadd.f32 %v79, %v385
    %387 = vmatprep.mubr.bf16.mxu0 0
    %388 = vmatmul.mubr.bf16.gmra.mxu0 %v226
    %v389 = vpop.f32.mrf.mxu0
    %v390 = vadd.f32 %v75, %v389
    %v391 = vpop.f32.mrf.mxu0
    %v392 = vadd.f32 %v79, %v391
    %v393 = vpop.f32.mrf.mxu0
    %v394 = vadd.f32 %v75, %v393
    %v395 = vpop.f32.mrf.mxu0
    %v396 = vadd.f32 %v79, %v395
    %397 = vmatprep.mubr.bf16.mxu0 0
    %398 = vmatmul.mubr.bf16.gmra.mxu0 %v229
    %v399 = vpop.f32.mrf.mxu0
    %v400 = vadd.f32 %v75, %v399
    %v401 = vpop.f32.mrf.mxu0
    %v402 = vadd.f32 %v79, %v401
    %v403 = vpop.f32.mrf.mxu0
    %v404 = vadd.f32 %v75, %v403
    %v405 = vpop.f32.mrf.mxu0
    %v406 = vadd.f32 %v79, %v405
    %407 = vmatprep.mubr.bf16.mxu0 0
    %408 = vmatmul.mubr.bf16.gmra.mxu0 %v232
    %v409 = vpop.f32.mrf.mxu0
    %v410 = vadd.f32 %v75, %v409
    %v411 = vpop.f32.mrf.mxu0
    %v412 = vadd.f32 %v79, %v411
    %v413 = vpop.f32.mrf.mxu0
    %v414 = vadd.f32 %v75, %v413
    %v415 = vpop.f32.mrf.mxu0
    %v416 = vadd.f32 %v79, %v415
    %417 = vmatprep.mubr.bf16.mxu0 0
    %418 = vmatmul.mubr.bf16.gmra.mxu0 %v235
    %v419 = vpop.f32.mrf.mxu0
    %v420 = vadd.f32 %v75, %v419
    %v421 = vpop.f32.mrf.mxu0
    %v422 = vadd.f32 %v79, %v421
    %v423 = vpop.f32.mrf.mxu0
    %v424 = vadd.f32 %v75, %v423
    %v425 = vpop.f32.mrf.mxu0
    %v426 = vadd.f32 %v79, %v425
    %427 = vmatprep.mubr.bf16.mxu0 0
    %428 = vmatmul.mubr.bf16.gmra.mxu0 %v238
    %v429 = vpop.f32.mrf.mxu0
    %v430 = vadd.f32 %v75, %v429
    %v431 = vpop.f32.mrf.mxu0
    %v432 = vadd.f32 %v79, %v431
    %v433 = vpop.f32.mrf.mxu0
    %v434 = vadd.f32 %v75, %v433
    %v435 = vpop.f32.mrf.mxu0
    %v436 = vadd.f32 %v79, %v435
    %437 = vmatprep.mubr.bf16.mxu0 0
    %438 = vmatmul.mubr.bf16.gmra.mxu0 %v241
    %v439 = vpop.f32.mrf.mxu0
    %v440 = vadd.f32 %v75, %v439
    %v441 = vpop.f32.mrf.mxu0
    %v442 = vadd.f32 %v79, %v441
    %v443 = vpop.f32.mrf.mxu0
    %v444 = vadd.f32 %v75, %v443
    %v445 = vpop.f32.mrf.mxu0
    %v446 = vadd.f32 %v79, %v445
    %447 = vmatprep.mubr.bf16.mxu0 0
    %448 = vmatmul.mubr.bf16.gmra.mxu0 %v244
    %v449 = vpop.f32.mrf.mxu0
    %v450 = vadd.f32 %v75, %v449
    %v451 = vpop.f32.mrf.mxu0
    %v452 = vadd.f32 %v79, %v451
    %v453 = vpop.f32.mrf.mxu0
    %v454 = vadd.f32 %v75, %v453
    %v455 = vpop.f32.mrf.mxu0
    %v456 = vadd.f32 %v79, %v455
    %457 = vdwg.mxu0
    %458 = vmatprep.subr.bf16.mxu0 0
    %459 = vmatpush1.bf16.msra.mxu0 0
    %460 = vmatprep.subr.bf16.mxu0 0
    %461 = vmatpush1.bf16.msra.mxu0 0
    %462 = vmatprep.subr.bf16.mxu0 0
    %463 = vmatpush1.bf16.msra.mxu0 0
    %464 = vmatprep.subr.bf16.mxu0 0
    %465 = vmatpush1.bf16.msra.mxu0 0
    %466 = vmatprep.subr.bf16.mxu0 0
    %467 = vmatpush1.bf16.msra.mxu0 0
    %468 = vmatprep.subr.bf16.mxu0 0
    %469 = vmatpush1.bf16.msra.mxu0 0
    %470 = vmatprep.subr.bf16.mxu0 0
    %471 = vmatpush1.bf16.msra.mxu0 0
    %472 = vmatprep.subr.bf16.mxu0 %v257
    %473 = vmatpush1.bf16.msra.mxu0 %v254
    %474 = vmatprep.subr.bf16.mxu0 0
    %475 = vmatpush2.bf16.msra.mxu0 0
    %476 = vmatprep.subr.bf16.mxu0 0
    %477 = vmatpush2.bf16.msra.mxu0 0
    %478 = vmatprep.subr.bf16.mxu0 0
    %479 = vmatpush2.bf16.msra.mxu0 0
    %480 = vmatprep.subr.bf16.mxu0 0
    %481 = vmatpush2.bf16.msra.mxu0 0
    %482 = vmatprep.subr.bf16.mxu0 0
    %483 = vmatpush2.bf16.msra.mxu0 0
    %484 = vmatprep.subr.bf16.mxu0 0
    %485 = vmatpush2.bf16.msra.mxu0 0
    %486 = vmatprep.subr.bf16.mxu0 0
    %487 = vmatpush2.bf16.msra.mxu0 0
    %488 = vmatprep.subr.bf16.mxu0 0
    %489 = vmatpush2.bf16.msra.mxu0 0
    %490 = vmatprep.mubr.bf16.mxu0 0
    %491 = vmatmul.mubr.bf16.gmra.mxu0 %v199
    %v492 = vpop.f32.mrf.mxu0
    %v493 = vadd.f32 %v83, %v492
    %v494 = vpop.f32.mrf.mxu0
    %v495 = vadd.f32 %v87, %v494
    %v496 = vpop.f32.mrf.mxu0
    %v497 = vadd.f32 %v83, %v496
    %v498 = vpop.f32.mrf.mxu0
    %v499 = vadd.f32 %v87, %v498
    %500 = vmatprep.mubr.bf16.mxu0 0
    %501 = vmatmul.mubr.bf16.gmra.mxu0 %v202
    %v502 = vpop.f32.mrf.mxu0
    %v503 = vadd.f32 %v83, %v502
    %v504 = vpop.f32.mrf.mxu0
    %v505 = vadd.f32 %v87, %v504
    %v506 = vpop.f32.mrf.mxu0
    %v507 = vadd.f32 %v83, %v506
    %v508 = vpop.f32.mrf.mxu0
    %v509 = vadd.f32 %v87, %v508
    %510 = vmatprep.mubr.bf16.mxu0 0
    %511 = vmatmul.mubr.bf16.gmra.mxu0 %v205
    %v512 = vpop.f32.mrf.mxu0
    %v513 = vadd.f32 %v83, %v512
    %v514 = vpop.f32.mrf.mxu0
    %v515 = vadd.f32 %v87, %v514
    %v516 = vpop.f32.mrf.mxu0
    %v517 = vadd.f32 %v83, %v516
    %v518 = vpop.f32.mrf.mxu0
    %v519 = vadd.f32 %v87, %v518
    %520 = vmatprep.mubr.bf16.mxu0 0
    %521 = vmatmul.mubr.bf16.gmra.mxu0 %v208
    %v522 = vpop.f32.mrf.mxu0
    %v523 = vadd.f32 %v83, %v522
    %v524 = vpop.f32.mrf.mxu0
    %v525 = vadd.f32 %v87, %v524
    %v526 = vpop.f32.mrf.mxu0
    %v527 = vadd.f32 %v83, %v526
    %v528 = vpop.f32.mrf.mxu0
    %v529 = vadd.f32 %v87, %v528
    %530 = vmatprep.mubr.bf16.mxu0 0
    %531 = vmatmul.mubr.bf16.gmra.mxu0 %v211
    %v532 = vpop.f32.mrf.mxu0
    %v533 = vadd.f32 %v83, %v532
    %v534 = vpop.f32.mrf.mxu0
    %v535 = vadd.f32 %v87, %v534
    %v536 = vpop.f32.mrf.mxu0
    %v537 = vadd.f32 %v83, %v536
    %v538 = vpop.f32.mrf.mxu0
    %v539 = vadd.f32 %v87, %v538
    %540 = vmatprep.mubr.bf16.mxu0 0
    %541 = vmatmul.mubr.bf16.gmra.mxu0 %v214
    %v542 = vpop.f32.mrf.mxu0
    %v543 = vadd.f32 %v83, %v542
    %v544 = vpop.f32.mrf.mxu0
    %v545 = vadd.f32 %v87, %v544
    %v546 = vpop.f32.mrf.mxu0
    %v547 = vadd.f32 %v83, %v546
    %v548 = vpop.f32.mrf.mxu0
    %v549 = vadd.f32 %v87, %v548
    %550 = vmatprep.mubr.bf16.mxu0 0
    %551 = vmatmul.mubr.bf16.gmra.mxu0 %v217
    %v552 = vpop.f32.mrf.mxu0
    %v553 = vadd.f32 %v83, %v552
    %v554 = vpop.f32.mrf.mxu0
    %v555 = vadd.f32 %v87, %v554
    %v556 = vpop.f32.mrf.mxu0
    %v557 = vadd.f32 %v83, %v556
    %v558 = vpop.f32.mrf.mxu0
    %v559 = vadd.f32 %v87, %v558
    %560 = vmatprep.mubr.bf16.mxu0 0
    %561 = vmatmul.mubr.bf16.gmra.mxu0 %v220
    %v562 = vpop.f32.mrf.mxu0
    %v563 = vadd.f32 %v83, %v562
    %v564 = vpop.f32.mrf.mxu0
    %v565 = vadd.f32 %v87, %v564
    %v566 = vpop.f32.mrf.mxu0
    %v567 = vadd.f32 %v83, %v566
    %v568 = vpop.f32.mrf.mxu0
    %v569 = vadd.f32 %v87, %v568
    %570 = vmatprep.mubr.bf16.mxu0 0
    %571 = vmatmul.mubr.bf16.gmra.mxu0 %v223
    %v572 = vpop.f32.mrf.mxu0
    %v573 = vadd.f32 %v83, %v572
    %v574 = vpop.f32.mrf.mxu0
    %v575 = vadd.f32 %v87, %v574
    %v576 = vpop.f32.mrf.mxu0
    %v577 = vadd.f32 %v83, %v576
    %v578 = vpop.f32.mrf.mxu0
    %v579 = vadd.f32 %v87, %v578
    %580 = vmatprep.mubr.bf16.mxu0 0
    %581 = vmatmul.mubr.bf16.gmra.mxu0 %v226
    %v582 = vpop.f32.mrf.mxu0
    %v583 = vadd.f32 %v83, %v582
    %v584 = vpop.f32.mrf.mxu0
    %v585 = vadd.f32 %v87, %v584
    %v586 = vpop.f32.mrf.mxu0
    %v587 = vadd.f32 %v83, %v586
    %v588 = vpop.f32.mrf.mxu0
    %v589 = vadd.f32 %v87, %v588
    %590 = vmatprep.mubr.bf16.mxu0 0
    %591 = vmatmul.mubr.bf16.gmra.mxu0 %v229
    %v592 = vpop.f32.mrf.mxu0
    %v593 = vadd.f32 %v83, %v592
    %v594 = vpop.f32.mrf.mxu0
    %v595 = vadd.f32 %v87, %v594
    %v596 = vpop.f32.mrf.mxu0
    %v597 = vadd.f32 %v83, %v596
    %v598 = vpop.f32.mrf.mxu0
    %v599 = vadd.f32 %v87, %v598
    %600 = vmatprep.mubr.bf16.mxu0 0
    %601 = vmatmul.mubr.bf16.gmra.mxu0 %v232
    %v602 = vpop.f32.mrf.mxu0
    %v603 = vadd.f32 %v83, %v602
    %v604 = vpop.f32.mrf.mxu0
    %v605 = vadd.f32 %v87, %v604
    %v606 = vpop.f32.mrf.mxu0
    %v607 = vadd.f32 %v83, %v606
    %v608 = vpop.f32.mrf.mxu0
    %v609 = vadd.f32 %v87, %v608
    %610 = vmatprep.mubr.bf16.mxu0 0
    %611 = vmatmul.mubr.bf16.gmra.mxu0 %v235
    %v612 = vpop.f32.mrf.mxu0
    %v613 = vadd.f32 %v83, %v612
    %v614 = vpop.f32.mrf.mxu0
    %v615 = vadd.f32 %v87, %v614
    %v616 = vpop.f32.mrf.mxu0
    %v617 = vadd.f32 %v83, %v616
    %v618 = vpop.f32.mrf.mxu0
    %v619 = vadd.f32 %v87, %v618
    %620 = vmatprep.mubr.bf16.mxu0 0
    %621 = vmatmul.mubr.bf16.gmra.mxu0 %v238
    %v622 = vpop.f32.mrf.mxu0
    %v623 = vadd.f32 %v83, %v622
    %v624 = vpop.f32.mrf.mxu0
    %v625 = vadd.f32 %v87, %v624
    %v626 = vpop.f32.mrf.mxu0
    %v627 = vadd.f32 %v83, %v626
    %v628 = vpop.f32.mrf.mxu0
    %v629 = vadd.f32 %v87, %v628
    %630 = vmatprep.mubr.bf16.mxu0 0
    %631 = vmatmul.mubr.bf16.gmra.mxu0 %v241
    %v632 = vpop.f32.mrf.mxu0
    %v633 = vadd.f32 %v83, %v632
    %v634 = vpop.f32.mrf.mxu0
    %v635 = vadd.f32 %v87, %v634
    %v636 = vpop.f32.mrf.mxu0
    %v637 = vadd.f32 %v83, %v636
    %v638 = vpop.f32.mrf.mxu0
    %v639 = vadd.f32 %v87, %v638
    %640 = vmatprep.mubr.bf16.mxu0 0
    %641 = vmatmul.mubr.bf16.gmra.mxu0 %v244
    %v642 = vpop.f32.mrf.mxu0
    %v643 = vadd.f32 %v83, %v642
    %v644 = vpop.f32.mrf.mxu0
    %v645 = vadd.f32 %v87, %v644
    %v646 = vpop.f32.mrf.mxu0
    %v647 = vadd.f32 %v83, %v646
    %v648 = vpop.f32.mrf.mxu0
    %v649 = vadd.f32 %v87, %v648
    %650 = vdwg.mxu0
    %651 = vmatprep.subr.bf16.mxu0 0
    %652 = vmatpush1.bf16.msra.mxu0 0
    %653 = vmatprep.subr.bf16.mxu0 0
    %654 = vmatpush1.bf16.msra.mxu0 0
    %655 = vmatprep.subr.bf16.mxu0 0
    %656 = vmatpush1.bf16.msra.mxu0 0
    %657 = vmatprep.subr.bf16.mxu0 0
    %658 = vmatpush1.bf16.msra.mxu0 0
    %659 = vmatprep.subr.bf16.mxu0 0
    %660 = vmatpush1.bf16.msra.mxu0 0
    %661 = vmatprep.subr.bf16.mxu0 0
    %662 = vmatpush1.bf16.msra.mxu0 0
    %663 = vmatprep.subr.bf16.mxu0 0
    %664 = vmatpush1.bf16.msra.mxu0 0
    %665 = vmatprep.subr.bf16.mxu0 %v263
    %666 = vmatpush1.bf16.msra.mxu0 %v260
    %667 = vmatprep.subr.bf16.mxu0 0
    %668 = vmatpush2.bf16.msra.mxu0 0
    %669 = vmatprep.subr.bf16.mxu0 0
    %670 = vmatpush2.bf16.msra.mxu0 0
    %671 = vmatprep.subr.bf16.mxu0 0
    %672 = vmatpush2.bf16.msra.mxu0 0
    %673 = vmatprep.subr.bf16.mxu0 0
    %674 = vmatpush2.bf16.msra.mxu0 0
    %675 = vmatprep.subr.bf16.mxu0 0
    %676 = vmatpush2.bf16.msra.mxu0 0
    %677 = vmatprep.subr.bf16.mxu0 0
    %678 = vmatpush2.bf16.msra.mxu0 0
    %679 = vmatprep.subr.bf16.mxu0 0
    %680 = vmatpush2.bf16.msra.mxu0 0
    %681 = vmatprep.subr.bf16.mxu0 0
    %682 = vmatpush2.bf16.msra.mxu0 0
    %683 = vmatprep.mubr.bf16.mxu0 0
    %684 = vmatmul.mubr.bf16.gmra.mxu0 %v199
    %v685 = vpop.f32.mrf.mxu0
    %v686 = vadd.f32 %v91, %v685
    %v687 = vpop.f32.mrf.mxu0
    %v688 = vadd.f32 %v95, %v687
    %v689 = vpop.f32.mrf.mxu0
    %v690 = vadd.f32 %v91, %v689
    %v691 = vpop.f32.mrf.mxu0
    %v692 = vadd.f32 %v95, %v691
    %693 = vmatprep.mubr.bf16.mxu0 0
    %694 = vmatmul.mubr.bf16.gmra.mxu0 %v202
    %v695 = vpop.f32.mrf.mxu0
    %v696 = vadd.f32 %v91, %v695
    %v697 = vpop.f32.mrf.mxu0
    %v698 = vadd.f32 %v95, %v697
    %v699 = vpop.f32.mrf.mxu0
    %v700 = vadd.f32 %v91, %v699
    %v701 = vpop.f32.mrf.mxu0
    %v702 = vadd.f32 %v95, %v701
    %703 = vmatprep.mubr.bf16.mxu0 0
    %704 = vmatmul.mubr.bf16.gmra.mxu0 %v205
    %v705 = vpop.f32.mrf.mxu0
    %v706 = vadd.f32 %v91, %v705
    %v707 = vpop.f32.mrf.mxu0
    %v708 = vadd.f32 %v95, %v707
    %v709 = vpop.f32.mrf.mxu0
    %v710 = vadd.f32 %v91, %v709
    %v711 = vpop.f32.mrf.mxu0
    %v712 = vadd.f32 %v95, %v711
    %713 = vmatprep.mubr.bf16.mxu0 0
    %714 = vmatmul.mubr.bf16.gmra.mxu0 %v208
    %v715 = vpop.f32.mrf.mxu0
    %v716 = vadd.f32 %v91, %v715
    %v717 = vpop.f32.mrf.mxu0
    %v718 = vadd.f32 %v95, %v717
    %v719 = vpop.f32.mrf.mxu0
    %v720 = vadd.f32 %v91, %v719
    %v721 = vpop.f32.mrf.mxu0
    %v722 = vadd.f32 %v95, %v721
    %723 = vmatprep.mubr.bf16.mxu0 0
    %724 = vmatmul.mubr.bf16.gmra.mxu0 %v211
    %v725 = vpop.f32.mrf.mxu0
    %v726 = vadd.f32 %v91, %v725
    %v727 = vpop.f32.mrf.mxu0
    %v728 = vadd.f32 %v95, %v727
    %v729 = vpop.f32.mrf.mxu0
    %v730 = vadd.f32 %v91, %v729
    %v731 = vpop.f32.mrf.mxu0
    %v732 = vadd.f32 %v95, %v731
    %733 = vmatprep.mubr.bf16.mxu0 0
    %734 = vmatmul.mubr.bf16.gmra.mxu0 %v214
    %v735 = vpop.f32.mrf.mxu0
    %v736 = vadd.f32 %v91, %v735
    %v737 = vpop.f32.mrf.mxu0
    %v738 = vadd.f32 %v95, %v737
    %v739 = vpop.f32.mrf.mxu0
    %v740 = vadd.f32 %v91, %v739
    %v741 = vpop.f32.mrf.mxu0
    %v742 = vadd.f32 %v95, %v741
    %743 = vmatprep.mubr.bf16.mxu0 0
    %744 = vmatmul.mubr.bf16.gmra.mxu0 %v217
    %v745 = vpop.f32.mrf.mxu0
    %v746 = vadd.f32 %v91, %v745
    %v747 = vpop.f32.mrf.mxu0
    %v748 = vadd.f32 %v95, %v747
    %v749 = vpop.f32.mrf.mxu0
    %v750 = vadd.f32 %v91, %v749
    %v751 = vpop.f32.mrf.mxu0
    %v752 = vadd.f32 %v95, %v751
    %753 = vmatprep.mubr.bf16.mxu0 0
    %754 = vmatmul.mubr.bf16.gmra.mxu0 %v220
    %v755 = vpop.f32.mrf.mxu0
    %v756 = vadd.f32 %v91, %v755
    %v757 = vpop.f32.mrf.mxu0
    %v758 = vadd.f32 %v95, %v757
    %v759 = vpop.f32.mrf.mxu0
    %v760 = vadd.f32 %v91, %v759
    %v761 = vpop.f32.mrf.mxu0
    %v762 = vadd.f32 %v95, %v761
    %763 = vmatprep.mubr.bf16.mxu0 0
    %764 = vmatmul.mubr.bf16.gmra.mxu0 %v223
    %v765 = vpop.f32.mrf.mxu0
    %v766 = vadd.f32 %v91, %v765
    %v767 = vpop.f32.mrf.mxu0
    %v768 = vadd.f32 %v95, %v767
    %v769 = vpop.f32.mrf.mxu0
    %v770 = vadd.f32 %v91, %v769
    %v771 = vpop.f32.mrf.mxu0
    %v772 = vadd.f32 %v95, %v771
    %773 = vmatprep.mubr.bf16.mxu0 0
    %774 = vmatmul.mubr.bf16.gmra.mxu0 %v226
    %v775 = vpop.f32.mrf.mxu0
    %v776 = vadd.f32 %v91, %v775
    %v777 = vpop.f32.mrf.mxu0
    %v778 = vadd.f32 %v95, %v777
    %v779 = vpop.f32.mrf.mxu0
    %v780 = vadd.f32 %v91, %v779
    %v781 = vpop.f32.mrf.mxu0
    %v782 = vadd.f32 %v95, %v781
    %783 = vmatprep.mubr.bf16.mxu0 0
    %784 = vmatmul.mubr.bf16.gmra.mxu0 %v229
    %v785 = vpop.f32.mrf.mxu0
    %v786 = vadd.f32 %v91, %v785
    %v787 = vpop.f32.mrf.mxu0
    %v788 = vadd.f32 %v95, %v787
    %v789 = vpop.f32.mrf.mxu0
    %v790 = vadd.f32 %v91, %v789
    %v791 = vpop.f32.mrf.mxu0
    %v792 = vadd.f32 %v95, %v791
    %793 = vmatprep.mubr.bf16.mxu0 0
    %794 = vmatmul.mubr.bf16.gmra.mxu0 %v232
    %v795 = vpop.f32.mrf.mxu0
    %v796 = vadd.f32 %v91, %v795
    %v797 = vpop.f32.mrf.mxu0
    %v798 = vadd.f32 %v95, %v797
    %v799 = vpop.f32.mrf.mxu0
    %v800 = vadd.f32 %v91, %v799
    %v801 = vpop.f32.mrf.mxu0
    %v802 = vadd.f32 %v95, %v801
    %803 = vmatprep.mubr.bf16.mxu0 0
    %804 = vmatmul.mubr.bf16.gmra.mxu0 %v235
    %v805 = vpop.f32.mrf.mxu0
    %v806 = vadd.f32 %v91, %v805
    %v807 = vpop.f32.mrf.mxu0
    %v808 = vadd.f32 %v95, %v807
    %v809 = vpop.f32.mrf.mxu0
    %v810 = vadd.f32 %v91, %v809
    %v811 = vpop.f32.mrf.mxu0
    %v812 = vadd.f32 %v95, %v811
    %813 = vmatprep.mubr.bf16.mxu0 0
    %814 = vmatmul.mubr.bf16.gmra.mxu0 %v238
    %v815 = vpop.f32.mrf.mxu0
    %v816 = vadd.f32 %v91, %v815
    %v817 = vpop.f32.mrf.mxu0
    %v818 = vadd.f32 %v95, %v817
    %v819 = vpop.f32.mrf.mxu0
    %v820 = vadd.f32 %v91, %v819
    %v821 = vpop.f32.mrf.mxu0
    %v822 = vadd.f32 %v95, %v821
    %823 = vmatprep.mubr.bf16.mxu0 0
    %824 = vmatmul.mubr.bf16.gmra.mxu0 %v241
    %v825 = vpop.f32.mrf.mxu0
    %v826 = vadd.f32 %v91, %v825
    %v827 = vpop.f32.mrf.mxu0
    %v828 = vadd.f32 %v95, %v827
    %v829 = vpop.f32.mrf.mxu0
    %v830 = vadd.f32 %v91, %v829
    %v831 = vpop.f32.mrf.mxu0
    %v832 = vadd.f32 %v95, %v831
    %833 = vmatprep.mubr.bf16.mxu0 0
    %834 = vmatmul.mubr.bf16.gmra.mxu0 %v244
    %v835 = vpop.f32.mrf.mxu0
    %v836 = vadd.f32 %v91, %v835
    %v837 = vpop.f32.mrf.mxu0
    %v838 = vadd.f32 %v95, %v837
    %v839 = vpop.f32.mrf.mxu0
    %v840 = vadd.f32 %v91, %v839
    %v841 = vpop.f32.mrf.mxu0
    %v842 = vadd.f32 %v95, %v841
    %843 = vdwg.mxu0
    %v844 = vmax.f32 %v300, 0.0
    %v845 = vmax.f32 %v302, 0.0
    %v846 = vmax.f32 %v493, 0.0
    %v847 = vmax.f32 %v495, 0.0
    %v848 = vmax.f32 %v686, 0.0
    %v849 = vmax.f32 %v688, 0.0
    %v850 = vmax.f32 %v304, 0.0
    %v851 = vmax.f32 %v306, 0.0
    %v852 = vmax.f32 %v497, 0.0
    %v853 = vmax.f32 %v499, 0.0
    %v854 = vmax.f32 %v690, 0.0
    %v855 = vmax.f32 %v692, 0.0
    %v856 = vmax.f32 %v310, 0.0
    %v857 = vmax.f32 %v312, 0.0
    %v858 = vmax.f32 %v503, 0.0
    %v859 = vmax.f32 %v505, 0.0
    %v860 = vmax.f32 %v696, 0.0
    %v861 = vmax.f32 %v698, 0.0
    %v862 = vmax.f32 %v314, 0.0
    %v863 = vmax.f32 %v316, 0.0
    %v864 = vmax.f32 %v507, 0.0
    %v865 = vmax.f32 %v509, 0.0
    %v866 = vmax.f32 %v700, 0.0
    %v867 = vmax.f32 %v702, 0.0
    %v868 = vmax.f32 %v320, 0.0
    %v869 = vmax.f32 %v322, 0.0
    %v870 = vmax.f32 %v513, 0.0
    %v871 = vmax.f32 %v515, 0.0
    %v872 = vmax.f32 %v706, 0.0
    %v873 = vmax.f32 %v708, 0.0
    %v874 = vmax.f32 %v324, 0.0
    %v875 = vmax.f32 %v326, 0.0
    %v876 = vmax.f32 %v517, 0.0
    %v877 = vmax.f32 %v519, 0.0
    %v878 = vmax.f32 %v710, 0.0
    %v879 = vmax.f32 %v712, 0.0
    %v880 = vmax.f32 %v330, 0.0
    %v881 = vmax.f32 %v332, 0.0
    %v882 = vmax.f32 %v523, 0.0
    %v883 = vmax.f32 %v525, 0.0
    %v884 = vmax.f32 %v716, 0.0
    %v885 = vmax.f32 %v718, 0.0
    %v886 = vmax.f32 %v334, 0.0
    %v887 = vmax.f32 %v336, 0.0
    %v888 = vmax.f32 %v527, 0.0
    %v889 = vmax.f32 %v529, 0.0
    %v890 = vmax.f32 %v720, 0.0
    %v891 = vmax.f32 %v722, 0.0
    %v892 = vmax.f32 %v340, 0.0
    %v893 = vmax.f32 %v342, 0.0
    %v894 = vmax.f32 %v533, 0.0
    %v895 = vmax.f32 %v535, 0.0
    %v896 = vmax.f32 %v726, 0.0
    %v897 = vmax.f32 %v728, 0.0
    %v898 = vmax.f32 %v344, 0.0
    %v899 = vmax.f32 %v346, 0.0
    %v900 = vmax.f32 %v537, 0.0
    %v901 = vmax.f32 %v539, 0.0
    %v902 = vmax.f32 %v730, 0.0
    %v903 = vmax.f32 %v732, 0.0
    %v904 = vmax.f32 %v350, 0.0
    %v905 = vmax.f32 %v352, 0.0
    %v906 = vmax.f32 %v543, 0.0
    %v907 = vmax.f32 %v545, 0.0
    %v908 = vmax.f32 %v736, 0.0
    %v909 = vmax.f32 %v738, 0.0
    %v910 = vmax.f32 %v354, 0.0
    %v911 = vmax.f32 %v356, 0.0
    %v912 = vmax.f32 %v547, 0.0
    %v913 = vmax.f32 %v549, 0.0
    %v914 = vmax.f32 %v740, 0.0
    %v915 = vmax.f32 %v742, 0.0
    %v916 = vmax.f32 %v360, 0.0
    %v917 = vmax.f32 %v362, 0.0
    %v918 = vmax.f32 %v553, 0.0
    %v919 = vmax.f32 %v555, 0.0
    %v920 = vmax.f32 %v746, 0.0
    %v921 = vmax.f32 %v748, 0.0
    %v922 = vmax.f32 %v364, 0.0
    %v923 = vmax.f32 %v366, 0.0
    %v924 = vmax.f32 %v557, 0.0
    %v925 = vmax.f32 %v559, 0.0
    %v926 = vmax.f32 %v750, 0.0
    %v927 = vmax.f32 %v752, 0.0
    %v928 = vmax.f32 %v370, 0.0
    %v929 = vmax.f32 %v372, 0.0
    %v930 = vmax.f32 %v563, 0.0
    %v931 = vmax.f32 %v565, 0.0
    %v932 = vmax.f32 %v756, 0.0
    %v933 = vmax.f32 %v758, 0.0
    %v934 = vmax.f32 %v374, 0.0
    %v935 = vmax.f32 %v376, 0.0
    %v936 = vmax.f32 %v567, 0.0
    %v937 = vmax.f32 %v569, 0.0
    %v938 = vmax.f32 %v760, 0.0
    %v939 = vmax.f32 %v762, 0.0
    %v940 = vmax.f32 %v380, 0.0
    %v941 = vmax.f32 %v382, 0.0
    %v942 = vmax.f32 %v573, 0.0
    %v943 = vmax.f32 %v575, 0.0
    %v944 = vmax.f32 %v766, 0.0
    %v945 = vmax.f32 %v768, 0.0
    %v946 = vmax.f32 %v384, 0.0
    %v947 = vmax.f32 %v386, 0.0
    %v948 = vmax.f32 %v577, 0.0
    %v949 = vmax.f32 %v579, 0.0
    %v950 = vmax.f32 %v770, 0.0
    %v951 = vmax.f32 %v772, 0.0
    %v952 = vmax.f32 %v390, 0.0
    %v953 = vmax.f32 %v392, 0.0
    %v954 = vmax.f32 %v583, 0.0
    %v955 = vmax.f32 %v585, 0.0
    %v956 = vmax.f32 %v776, 0.0
    %v957 = vmax.f32 %v778, 0.0
    %v958 = vmax.f32 %v394, 0.0
    %v959 = vmax.f32 %v396, 0.0
    %v960 = vmax.f32 %v587, 0.0
    %v961 = vmax.f32 %v589, 0.0
    %v962 = vmax.f32 %v780, 0.0
    %v963 = vmax.f32 %v782, 0.0
    %v964 = vmax.f32 %v400, 0.0
    %v965 = vmax.f32 %v402, 0.0
    %v966 = vmax.f32 %v593, 0.0
    %v967 = vmax.f32 %v595, 0.0
    %v968 = vmax.f32 %v786, 0.0
    %v969 = vmax.f32 %v788, 0.0
    %v970 = vmax.f32 %v404, 0.0
    %v971 = vmax.f32 %v406, 0.0
    %v972 = vmax.f32 %v597, 0.0
    %v973 = vmax.f32 %v599, 0.0
    %v974 = vmax.f32 %v790, 0.0
    %v975 = vmax.f32 %v792, 0.0
    %v976 = vmax.f32 %v410, 0.0
    %v977 = vmax.f32 %v412, 0.0
    %v978 = vmax.f32 %v603, 0.0
    %v979 = vmax.f32 %v605, 0.0
    %v980 = vmax.f32 %v796, 0.0
    %v981 = vmax.f32 %v798, 0.0
    %v982 = vmax.f32 %v414, 0.0
    %v983 = vmax.f32 %v416, 0.0
    %v984 = vmax.f32 %v607, 0.0
    %v985 = vmax.f32 %v609, 0.0
    %v986 = vmax.f32 %v800, 0.0
    %v987 = vmax.f32 %v802, 0.0
    %v988 = vmax.f32 %v420, 0.0
    %v989 = vmax.f32 %v422, 0.0
    %v990 = vmax.f32 %v613, 0.0
    %v991 = vmax.f32 %v615, 0.0
    %v992 = vmax.f32 %v806, 0.0
    %v993 = vmax.f32 %v808, 0.0
    %v994 = vmax.f32 %v424, 0.0
    %v995 = vmax.f32 %v426, 0.0
    %v996 = vmax.f32 %v617, 0.0
    %v997 = vmax.f32 %v619, 0.0
    %v998 = vmax.f32 %v810, 0.0
    %v999 = vmax.f32 %v812, 0.0
    %v1000 = vmax.f32 %v430, 0.0
    %v1001 = vmax.f32 %v432, 0.0
    %v1002 = vmax.f32 %v623, 0.0
    %v1003 = vmax.f32 %v625, 0.0
    %v1004 = vmax.f32 %v816, 0.0
    %v1005 = vmax.f32 %v818, 0.0
    %v1006 = vmax.f32 %v434, 0.0
    %v1007 = vmax.f32 %v436, 0.0
    %v1008 = vmax.f32 %v627, 0.0
    %v1009 = vmax.f32 %v629, 0.0
    %v1010 = vmax.f32 %v820, 0.0
    %v1011 = vmax.f32 %v822, 0.0
    %v1012 = vmax.f32 %v440, 0.0
    %v1013 = vmax.f32 %v442, 0.0
    %v1014 = vmax.f32 %v633, 0.0
    %v1015 = vmax.f32 %v635, 0.0
    %v1016 = vmax.f32 %v826, 0.0
    %v1017 = vmax.f32 %v828, 0.0
    %v1018 = vmax.f32 %v444, 0.0
    %v1019 = vmax.f32 %v446, 0.0
    %v1020 = vmax.f32 %v637, 0.0
    %v1021 = vmax.f32 %v639, 0.0
    %v1022 = vmax.f32 %v830, 0.0
    %v1023 = vmax.f32 %v832, 0.0
    %v1024 = vmax.f32 %v450, 0.0
    %v1025 = vmax.f32 %v452, 0.0
    %v1026 = vmax.f32 %v643, 0.0
    %v1027 = vmax.f32 %v645, 0.0
    %v1028 = vmax.f32 %v836, 0.0
    %v1029 = vmax.f32 %v838, 0.0
    %v1030 = vmax.f32 %v454, 0.0
    %v1031 = vmax.f32 %v456, 0.0
    %v1032 = vmax.f32 %v647, 0.0
    %v1033 = vmax.f32 %v649, 0.0
    %v1034 = vmax.f32 %v840, 0.0
    %v1035 = vmax.f32 %v842, 0.0
    %v1036 = vpack.c.bf16 %v850, %v844
    %v1037 = vpack.c.bf16 %v851, %v845
    %v1038 = vpack.c.bf16 %v852, %v846
    %v1039 = vpack.c.bf16 %v853, %v847
    %v1040 = vpack.c.bf16 %v854, %v848
    %v1041 = vpack.c.bf16 %v855, %v849
    %v1042 = vpack.c.bf16 %v862, %v856
    %v1043 = vpack.c.bf16 %v863, %v857
    %v1044 = vpack.c.bf16 %v864, %v858
    %v1045 = vpack.c.bf16 %v865, %v859
    %v1046 = vpack.c.bf16 %v866, %v860
    %v1047 = vpack.c.bf16 %v867, %v861
    %v1048 = vpack.c.bf16 %v874, %v868
    %v1049 = vpack.c.bf16 %v875, %v869
    %v1050 = vpack.c.bf16 %v876, %v870
    %v1051 = vpack.c.bf16 %v877, %v871
    %v1052 = vpack.c.bf16 %v878, %v872
    %v1053 = vpack.c.bf16 %v879, %v873
    %v1054 = vpack.c.bf16 %v886, %v880
    %v1055 = vpack.c.bf16 %v887, %v881
    %v1056 = vpack.c.bf16 %v888, %v882
    %v1057 = vpack.c.bf16 %v889, %v883
    %v1058 = vpack.c.bf16 %v890, %v884
    %v1059 = vpack.c.bf16 %v891, %v885
    %v1060 = vpack.c.bf16 %v898, %v892
    %v1061 = vpack.c.bf16 %v899, %v893
    %v1062 = vpack.c.bf16 %v900, %v894
    %v1063 = vpack.c.bf16 %v901, %v895
    %v1064 = vpack.c.bf16 %v902, %v896
    %v1065 = vpack.c.bf16 %v903, %v897
    %v1066 = vpack.c.bf16 %v910, %v904
    %v1067 = vpack.c.bf16 %v911, %v905
    %v1068 = vpack.c.bf16 %v912, %v906
    %v1069 = vpack.c.bf16 %v913, %v907
    %v1070 = vpack.c.bf16 %v914, %v908
    %v1071 = vpack.c.bf16 %v915, %v909
    %v1072 = vpack.c.bf16 %v922, %v916
    %v1073 = vpack.c.bf16 %v923, %v917
    %v1074 = vpack.c.bf16 %v924, %v918
    %v1075 = vpack.c.bf16 %v925, %v919
    %v1076 = vpack.c.bf16 %v926, %v920
    %v1077 = vpack.c.bf16 %v927, %v921
    %v1078 = vpack.c.bf16 %v934, %v928
    %v1079 = vpack.c.bf16 %v935, %v929
    %v1080 = vpack.c.bf16 %v936, %v930
    %v1081 = vpack.c.bf16 %v937, %v931
    %v1082 = vpack.c.bf16 %v938, %v932
    %v1083 = vpack.c.bf16 %v939, %v933
    %v1084 = vpack.c.bf16 %v946, %v940
    %v1085 = vpack.c.bf16 %v947, %v941
    %v1086 = vpack.c.bf16 %v948, %v942
    %v1087 = vpack.c.bf16 %v949, %v943
    %v1088 = vpack.c.bf16 %v950, %v944
    %v1089 = vpack.c.bf16 %v951, %v945
    %v1090 = vpack.c.bf16 %v958, %v952
    %v1091 = vpack.c.bf16 %v959, %v953
    %v1092 = vpack.c.bf16 %v960, %v954
    %v1093 = vpack.c.bf16 %v961, %v955
    %v1094 = vpack.c.bf16 %v962, %v956
    %v1095 = vpack.c.bf16 %v963, %v957
    %v1096 = vpack.c.bf16 %v970, %v964
    %v1097 = vpack.c.bf16 %v971, %v965
    %v1098 = vpack.c.bf16 %v972, %v966
    %v1099 = vpack.c.bf16 %v973, %v967
    %v1100 = vpack.c.bf16 %v974, %v968
    %v1101 = vpack.c.bf16 %v975, %v969
    %v1102 = vpack.c.bf16 %v982, %v976
    %v1103 = vpack.c.bf16 %v983, %v977
    %v1104 = vpack.c.bf16 %v984, %v978
    %v1105 = vpack.c.bf16 %v985, %v979
    %v1106 = vpack.c.bf16 %v986, %v980
    %v1107 = vpack.c.bf16 %v987, %v981
    %v1108 = vpack.c.bf16 %v994, %v988
    %v1109 = vpack.c.bf16 %v995, %v989
    %v1110 = vpack.c.bf16 %v996, %v990
    %v1111 = vpack.c.bf16 %v997, %v991
    %v1112 = vpack.c.bf16 %v998, %v992
    %v1113 = vpack.c.bf16 %v999, %v993
    %v1114 = vpack.c.bf16 %v1006, %v1000
    %v1115 = vpack.c.bf16 %v1007, %v1001
    %v1116 = vpack.c.bf16 %v1008, %v1002
    %v1117 = vpack.c.bf16 %v1009, %v1003
    %v1118 = vpack.c.bf16 %v1010, %v1004
    %v1119 = vpack.c.bf16 %v1011, %v1005
    %v1120 = vpack.c.bf16 %v1018, %v1012
    %v1121 = vpack.c.bf16 %v1019, %v1013
    %v1122 = vpack.c.bf16 %v1020, %v1014
    %v1123 = vpack.c.bf16 %v1021, %v1015
    %v1124 = vpack.c.bf16 %v1022, %v1016
    %v1125 = vpack.c.bf16 %v1023, %v1017
    %v1126 = vpack.c.bf16 %v1030, %v1024
    %v1127 = vpack.c.bf16 %v1031, %v1025
    %v1128 = vpack.c.bf16 %v1032, %v1026
    %v1129 = vpack.c.bf16 %v1033, %v1027
    %v1130 = vpack.c.bf16 %v1034, %v1028
    %v1131 = vpack.c.bf16 %v1035, %v1029
    %v1132 = vld [vmem:[#allocation2] sm:$0xf]
    %v1133 = vld [vmem:[#allocation2 + $0x4] sm:$0xf]
    %v1134 = vld [vmem:[#allocation2 + $0x8] sm:$0xf]
    %v1135 = vld [vmem:[#allocation2 + $0xc] sm:$0xf]
    %v1136 = vld [vmem:[#allocation2 + $0x10] sm:$0xf]
    %v1137 = vld [vmem:[#allocation2 + $0x14] sm:$0xf]
    %v1138 = vld [vmem:[#allocation2 + $0x18] sm:$0xf]
    %v1139 = vld [vmem:[#allocation2 + $0x1c] sm:$0xf]
    %v1140 = vld [vmem:[#allocation2 + $0x20] sm:$0xf]
    %v1141 = vld [vmem:[#allocation2 + $0x24] sm:$0xf]
    %v1142 = vld [vmem:[#allocation2 + $0x28] sm:$0xf]
    %v1143 = vld [vmem:[#allocation2 + $0x2c] sm:$0xf]
    %v1144 = vld [vmem:[#allocation2 + $0x30] sm:$0xf]
    %v1145 = vld [vmem:[#allocation2 + $0x34] sm:$0xf]
    %v1146 = vld [vmem:[#allocation2 + $0x38] sm:$0xf]
    %v1147 = vld [vmem:[#allocation2 + $0x3c] sm:$0xf]
    %v1148 = vld [vmem:[#allocation2 + $0x40] sm:$0xf]
    %v1149 = vld [vmem:[#allocation2 + $0x44] sm:$0xf]
    %v1150 = vld [vmem:[#allocation2 + $0x48] sm:$0xf]
    %v1151 = vld [vmem:[#allocation2 + $0x4c] sm:$0xf]
    %v1152 = vld [vmem:[#allocation2 + $0x50] sm:$0xf]
    %v1153 = vld [vmem:[#allocation2 + $0x54] sm:$0xf]
    %v1154 = vld [vmem:[#allocation2 + $0x58] sm:$0xf]
    %v1155 = vld [vmem:[#allocation2 + $0x5c] sm:$0xf]
    %v1156 = vld [vmem:[#allocation2 + $0x60] sm:$0xf]
    %v1157 = vld [vmem:[#allocation2 + $0x64] sm:$0xf]
    %v1158 = vld [vmem:[#allocation2 + $0x68] sm:$0xf]
    %v1159 = vld [vmem:[#allocation2 + $0x6c] sm:$0xf]
    %v1160 = vld [vmem:[#allocation2 + $0x70] sm:$0xf]
    %v1161 = vld [vmem:[#allocation2 + $0x74] sm:$0xf]
    %v1162 = vld [vmem:[#allocation2 + $0x78] sm:$0xf]
    %v1163 = vld [vmem:[#allocation2 + $0x7c] sm:$0xf]
    %v1164 = vld [vmem:[#allocation2 + $0x80] sm:$0xf]
    %v1165 = vld [vmem:[#allocation2 + $0x84] sm:$0xf]
    %v1166 = vld [vmem:[#allocation2 + $0x88] sm:$0xf]
    %v1167 = vld [vmem:[#allocation2 + $0x8c] sm:$0xf]
    %v1168 = vld [vmem:[#allocation2 + $0x90] sm:$0xf]
    %v1169 = vld [vmem:[#allocation2 + $0x94] sm:$0xf]
    %v1170 = vld [vmem:[#allocation2 + $0x98] sm:$0xf]
    %v1171 = vld [vmem:[#allocation2 + $0x9c] sm:$0xf]
    %v1172 = vld [vmem:[#allocation2 + $0xa0] sm:$0xf]
    %v1173 = vld [vmem:[#allocation2 + $0xa4] sm:$0xf]
    %v1174 = vld [vmem:[#allocation2 + $0xa8] sm:$0xf]
    %v1175 = vld [vmem:[#allocation2 + $0xac] sm:$0xf]
    %v1176 = vld [vmem:[#allocation2 + $0xb0] sm:$0xf]
    %v1177 = vld [vmem:[#allocation2 + $0xb4] sm:$0xf]
    %v1178 = vld [vmem:[#allocation2 + $0xb8] sm:$0xf]
    %v1179 = vld [vmem:[#allocation2 + $0xbc] sm:$0xf]
    %v1180 = vld [vmem:[#allocation2 + $0xc0] sm:$0xf]
    %v1181 = vld [vmem:[#allocation2 + $0xc4] sm:$0xf]
    %v1182 = vld [vmem:[#allocation2 + $0xc8] sm:$0xf]
    %v1183 = vld [vmem:[#allocation2 + $0xcc] sm:$0xf]
    %v1184 = vld [vmem:[#allocation2 + $0xd0] sm:$0xf]
    %v1185 = vld [vmem:[#allocation2 + $0xd4] sm:$0xf]
    %v1186 = vld [vmem:[#allocation2 + $0xd8] sm:$0xf]
    %v1187 = vld [vmem:[#allocation2 + $0xdc] sm:$0xf]
    %v1188 = vld [vmem:[#allocation2 + $0xe0] sm:$0xf]
    %v1189 = vld [vmem:[#allocation2 + $0xe4] sm:$0xf]
    %v1190 = vld [vmem:[#allocation2 + $0xe8] sm:$0xf]
    %v1191 = vld [vmem:[#allocation2 + $0xec] sm:$0xf]
    %v1192 = vld [vmem:[#allocation2 + $0xf0] sm:$0xf]
    %v1193 = vld [vmem:[#allocation2 + $0xf4] sm:$0xf]
    %v1194 = vld [vmem:[#allocation2 + $0xf8] sm:$0xf]
    %v1195 = vld [vmem:[#allocation2 + $0xfc] sm:$0xf]
    %v1196 = vld [vmem:[#allocation2 + $0x100] sm:$0xf]
    %v1197 = vld [vmem:[#allocation2 + $0x104] sm:$0xf]
    %v1198 = vld [vmem:[#allocation2 + $0x108] sm:$0xf]
    %v1199 = vld [vmem:[#allocation2 + $0x10c] sm:$0xf]
    %v1200 = vld [vmem:[#allocation2 + $0x110] sm:$0xf]
    %v1201 = vld [vmem:[#allocation2 + $0x114] sm:$0xf]
    %v1202 = vld [vmem:[#allocation2 + $0x118] sm:$0xf]
    %v1203 = vld [vmem:[#allocation2 + $0x11c] sm:$0xf]
    %v1204 = vld [vmem:[#allocation2 + $0x120] sm:$0xf]
    %v1205 = vld [vmem:[#allocation2 + $0x124] sm:$0xf]
    %v1206 = vld [vmem:[#allocation2 + $0x128] sm:$0xf]
    %v1207 = vld [vmem:[#allocation2 + $0x12c] sm:$0xf]
    %v1208 = vld [vmem:[#allocation2 + $0x130] sm:$0xf]
    %v1209 = vld [vmem:[#allocation2 + $0x134] sm:$0xf]
    %v1210 = vld [vmem:[#allocation2 + $0x138] sm:$0xf]
    %v1211 = vld [vmem:[#allocation2 + $0x13c] sm:$0xf]
    %v1212 = vld [vmem:[#allocation2 + $0x140] sm:$0xf]
    %v1213 = vld [vmem:[#allocation2 + $0x144] sm:$0xf]
    %v1214 = vld [vmem:[#allocation2 + $0x148] sm:$0xf]
    %v1215 = vld [vmem:[#allocation2 + $0x14c] sm:$0xf]
    %v1216 = vld [vmem:[#allocation2 + $0x150] sm:$0xf]
    %v1217 = vld [vmem:[#allocation2 + $0x154] sm:$0xf]
    %v1218 = vld [vmem:[#allocation2 + $0x158] sm:$0xf]
    %v1219 = vld [vmem:[#allocation2 + $0x15c] sm:$0xf]
    %v1220 = vld [vmem:[#allocation2 + $0x160] sm:$0xf]
    %v1221 = vld [vmem:[#allocation2 + $0x164] sm:$0xf]
    %v1222 = vld [vmem:[#allocation2 + $0x168] sm:$0xf]
    %v1223 = vld [vmem:[#allocation2 + $0x16c] sm:$0xf]
    %v1224 = vld [vmem:[#allocation2 + $0x170] sm:$0xf]
    %v1225 = vld [vmem:[#allocation2 + $0x174] sm:$0xf]
    %v1226 = vld [vmem:[#allocation2 + $0x178] sm:$0xf]
    %v1227 = vld [vmem:[#allocation2 + $0x17c] sm:$0xf]
    %v1228 = vld [vmem:[%s4] sm:$0x1]
    %v1230 = vlaneseq
    %v1231 = vshrl.u32 %v1230, 7
    %v1232 = vsub.s32 0, %v1231
    %v1233 = vrot.slane %v1228, %v1232
    %v1331 = vunpack.c.l.b16 %v1132
    %v1332 = vunpack.c.l.b16 %v1133
    %v1333 = vunpack.c.l.b16 %v1134
    %v1334 = vunpack.c.l.b16 %v1135
    %v1335 = vunpack.c.l.b16 %v1136
    %v1336 = vunpack.c.l.b16 %v1137
    %v1337 = vunpack.c.l.b16 %v1138
    %v1338 = vunpack.c.l.b16 %v1139
    %v1339 = vunpack.c.l.b16 %v1140
    %v1340 = vunpack.c.l.b16 %v1141
    %v1341 = vunpack.c.l.b16 %v1142
    %v1342 = vunpack.c.l.b16 %v1143
    %v1343 = vunpack.c.l.b16 %v1144
    %v1344 = vunpack.c.l.b16 %v1145
    %v1345 = vunpack.c.l.b16 %v1146
    %v1346 = vunpack.c.l.b16 %v1147
    %v1347 = vunpack.c.l.b16 %v1148
    %v1348 = vunpack.c.l.b16 %v1149
    %v1349 = vunpack.c.l.b16 %v1150
    %v1350 = vunpack.c.l.b16 %v1151
    %v1351 = vunpack.c.l.b16 %v1152
    %v1352 = vunpack.c.l.b16 %v1153
    %v1353 = vunpack.c.l.b16 %v1154
    %v1354 = vunpack.c.l.b16 %v1155
    %v1355 = vunpack.c.l.b16 %v1156
    %v1356 = vunpack.c.l.b16 %v1157
    %v1357 = vunpack.c.l.b16 %v1158
    %v1358 = vunpack.c.l.b16 %v1159
    %v1359 = vunpack.c.l.b16 %v1160
    %v1360 = vunpack.c.l.b16 %v1161
    %v1361 = vunpack.c.l.b16 %v1162
    %v1362 = vunpack.c.l.b16 %v1163
    %v1363 = vunpack.c.l.b16 %v1164
    %v1364 = vunpack.c.l.b16 %v1165
    %v1365 = vunpack.c.l.b16 %v1166
    %v1366 = vunpack.c.l.b16 %v1167
    %v1367 = vunpack.c.l.b16 %v1168
    %v1368 = vunpack.c.l.b16 %v1169
    %v1369 = vunpack.c.l.b16 %v1170
    %v1370 = vunpack.c.l.b16 %v1171
    %v1371 = vunpack.c.l.b16 %v1172
    %v1372 = vunpack.c.l.b16 %v1173
    %v1373 = vunpack.c.l.b16 %v1174
    %v1374 = vunpack.c.l.b16 %v1175
    %v1375 = vunpack.c.l.b16 %v1176
    %v1376 = vunpack.c.l.b16 %v1177
    %v1377 = vunpack.c.l.b16 %v1178
    %v1378 = vunpack.c.l.b16 %v1179
    %v1379 = vunpack.c.l.b16 %v1180
    %v1380 = vunpack.c.l.b16 %v1181
    %v1381 = vunpack.c.l.b16 %v1182
    %v1382 = vunpack.c.l.b16 %v1183
    %v1383 = vunpack.c.l.b16 %v1184
    %v1384 = vunpack.c.l.b16 %v1185
    %v1385 = vunpack.c.l.b16 %v1186
    %v1386 = vunpack.c.l.b16 %v1187
    %v1387 = vunpack.c.l.b16 %v1188
    %v1388 = vunpack.c.l.b16 %v1189
    %v1389 = vunpack.c.l.b16 %v1190
    %v1390 = vunpack.c.l.b16 %v1191
    %v1391 = vunpack.c.l.b16 %v1192
    %v1392 = vunpack.c.l.b16 %v1193
    %v1393 = vunpack.c.l.b16 %v1194
    %v1394 = vunpack.c.l.b16 %v1195
    %v1395 = vunpack.c.l.b16 %v1196
    %v1396 = vunpack.c.l.b16 %v1197
    %v1397 = vunpack.c.l.b16 %v1198
    %v1398 = vunpack.c.l.b16 %v1199
    %v1399 = vunpack.c.l.b16 %v1200
    %v1400 = vunpack.c.l.b16 %v1201
    %v1401 = vunpack.c.l.b16 %v1202
    %v1402 = vunpack.c.l.b16 %v1203
    %v1403 = vunpack.c.l.b16 %v1204
    %v1404 = vunpack.c.l.b16 %v1205
    %v1405 = vunpack.c.l.b16 %v1206
    %v1406 = vunpack.c.l.b16 %v1207
    %v1407 = vunpack.c.l.b16 %v1208
    %v1408 = vunpack.c.l.b16 %v1209
    %v1409 = vunpack.c.l.b16 %v1210
    %v1410 = vunpack.c.l.b16 %v1211
    %v1411 = vunpack.c.l.b16 %v1212
    %v1412 = vunpack.c.l.b16 %v1213
    %v1413 = vunpack.c.l.b16 %v1214
    %v1414 = vunpack.c.l.b16 %v1215
    %v1415 = vunpack.c.l.b16 %v1216
    %v1416 = vunpack.c.l.b16 %v1217
    %v1417 = vunpack.c.l.b16 %v1218
    %v1418 = vunpack.c.l.b16 %v1219
    %v1419 = vunpack.c.l.b16 %v1220
    %v1420 = vunpack.c.l.b16 %v1221
    %v1421 = vunpack.c.l.b16 %v1222
    %v1422 = vunpack.c.l.b16 %v1223
    %v1423 = vunpack.c.l.b16 %v1224
    %v1424 = vunpack.c.l.b16 %v1225
    %v1425 = vunpack.c.l.b16 %v1226
    %v1426 = vunpack.c.l.b16 %v1227
    %v1427 = vpack.c.b16 %v1332, %v1331
    %v1428 = vpack.c.b16 %v1334, %v1333
    %v1429 = vpack.c.b16 %v1336, %v1335
    %v1430 = vpack.c.b16 %v1338, %v1337
    %v1431 = vpack.c.b16 %v1340, %v1339
    %v1432 = vpack.c.b16 %v1342, %v1341
    %v1433 = vpack.c.b16 %v1344, %v1343
    %v1434 = vpack.c.b16 %v1346, %v1345
    %v1435 = vpack.c.b16 %v1348, %v1347
    %v1436 = vpack.c.b16 %v1350, %v1349
    %v1437 = vpack.c.b16 %v1352, %v1351
    %v1438 = vpack.c.b16 %v1354, %v1353
    %v1439 = vpack.c.b16 %v1356, %v1355
    %v1440 = vpack.c.b16 %v1358, %v1357
    %v1441 = vpack.c.b16 %v1360, %v1359
    %v1442 = vpack.c.b16 %v1362, %v1361
    %v1443 = vpack.c.b16 %v1364, %v1363
    %v1444 = vpack.c.b16 %v1366, %v1365
    %v1445 = vpack.c.b16 %v1368, %v1367
    %v1446 = vpack.c.b16 %v1370, %v1369
    %v1447 = vpack.c.b16 %v1372, %v1371
    %v1448 = vpack.c.b16 %v1374, %v1373
    %v1449 = vpack.c.b16 %v1376, %v1375
    %v1450 = vpack.c.b16 %v1378, %v1377
    %v1451 = vpack.c.b16 %v1380, %v1379
    %v1452 = vpack.c.b16 %v1382, %v1381
    %v1453 = vpack.c.b16 %v1384, %v1383
    %v1454 = vpack.c.b16 %v1386, %v1385
    %v1455 = vpack.c.b16 %v1388, %v1387
    %v1456 = vpack.c.b16 %v1390, %v1389
    %v1457 = vpack.c.b16 %v1392, %v1391
    %v1458 = vpack.c.b16 %v1394, %v1393
    %v1459 = vpack.c.b16 %v1396, %v1395
    %v1460 = vpack.c.b16 %v1398, %v1397
    %v1461 = vpack.c.b16 %v1400, %v1399
    %v1462 = vpack.c.b16 %v1402, %v1401
    %v1463 = vpack.c.b16 %v1404, %v1403
    %v1464 = vpack.c.b16 %v1406, %v1405
    %v1465 = vpack.c.b16 %v1408, %v1407
    %v1466 = vpack.c.b16 %v1410, %v1409
    %v1467 = vpack.c.b16 %v1412, %v1411
    %v1468 = vpack.c.b16 %v1414, %v1413
    %v1469 = vpack.c.b16 %v1416, %v1415
    %v1470 = vpack.c.b16 %v1418, %v1417
    %v1471 = vpack.c.b16 %v1420, %v1419
    %v1472 = vpack.c.b16 %v1422, %v1421
    %v1473 = vpack.c.b16 %v1424, %v1423
    %v1474 = vpack.c.b16 %v1426, %v1425
    %1523 = vmatprep.subr.bf16.mxu0 0
    %1524 = vmatpush1.bf16.msra.mxu0 %v1434
    %1525 = vmatprep.subr.bf16.mxu0 0
    %1526 = vmatpush1.bf16.msra.mxu0 %v1433
    %1527 = vmatprep.subr.bf16.mxu0 0
    %1528 = vmatpush1.bf16.msra.mxu0 %v1432
    %1529 = vmatprep.subr.bf16.mxu0 0
    %1530 = vmatpush1.bf16.msra.mxu0 %v1431
    %1531 = vmatprep.subr.bf16.mxu0 0
    %1532 = vmatpush1.bf16.msra.mxu0 %v1430
    %1533 = vmatprep.subr.bf16.mxu0 0
    %1534 = vmatpush1.bf16.msra.mxu0 %v1429
    %1535 = vmatprep.subr.bf16.mxu0 0
    %1536 = vmatpush1.bf16.msra.mxu0 %v1428
    %1537 = vmatprep.subr.bf16.mxu0 0
    %1538 = vmatpush1.bf16.msra.mxu0 %v1427
    %1539 = vmatprep.subr.bf16.mxu0 0
    %1540 = vmatpush2.bf16.msra.mxu0 %v1442
    %1541 = vmatprep.subr.bf16.mxu0 0
    %1542 = vmatpush2.bf16.msra.mxu0 %v1441
    %1543 = vmatprep.subr.bf16.mxu0 0
    %1544 = vmatpush2.bf16.msra.mxu0 %v1440
    %1545 = vmatprep.subr.bf16.mxu0 0
    %1546 = vmatpush2.bf16.msra.mxu0 %v1439
    %1547 = vmatprep.subr.bf16.mxu0 0
    %1548 = vmatpush2.bf16.msra.mxu0 %v1438
    %1549 = vmatprep.subr.bf16.mxu0 0
    %1550 = vmatpush2.bf16.msra.mxu0 %v1437
    %1551 = vmatprep.subr.bf16.mxu0 0
    %1552 = vmatpush2.bf16.msra.mxu0 %v1436
    %1553 = vmatprep.subr.bf16.mxu0 0
    %1554 = vmatpush2.bf16.msra.mxu0 %v1435
    %1555 = vmatprep.mubr.bf16.mxu0 %v1037
    %1556 = vmatmul.mubr.bf16.gmra.mxu0 %v1036
    %v1557 = vpop.f32.mrf.mxu0
    %v1558 = vadd.f32 %v1233, %v1557
    %v1559 = vpop.f32.mrf.mxu0
    %v1560 = vpop.f32.mrf.mxu0
    %v1561 = vadd.f32 %v1233, %v1560
    %v1562 = vpop.f32.mrf.mxu0
    %1563 = vmatprep.mubr.bf16.mxu0 %v1043
    %1564 = vmatmul.mubr.bf16.gmra.mxu0 %v1042
    %v1565 = vpop.f32.mrf.mxu0
    %v1566 = vadd.f32 %v1233, %v1565
    %v1567 = vpop.f32.mrf.mxu0
    %v1568 = vpop.f32.mrf.mxu0
    %v1569 = vadd.f32 %v1233, %v1568
    %v1570 = vpop.f32.mrf.mxu0
    %1571 = vmatprep.mubr.bf16.mxu0 %v1049
    %1572 = vmatmul.mubr.bf16.gmra.mxu0 %v1048
    %v1573 = vpop.f32.mrf.mxu0
    %v1574 = vadd.f32 %v1233, %v1573
    %v1575 = vpop.f32.mrf.mxu0
    %v1576 = vpop.f32.mrf.mxu0
    %v1577 = vadd.f32 %v1233, %v1576
    %v1578 = vpop.f32.mrf.mxu0
    %1579 = vmatprep.mubr.bf16.mxu0 %v1055
    %1580 = vmatmul.mubr.bf16.gmra.mxu0 %v1054
    %v1581 = vpop.f32.mrf.mxu0
    %v1582 = vadd.f32 %v1233, %v1581
    %v1583 = vpop.f32.mrf.mxu0
    %v1584 = vpop.f32.mrf.mxu0
    %v1585 = vadd.f32 %v1233, %v1584
    %v1586 = vpop.f32.mrf.mxu0
    %1587 = vmatprep.mubr.bf16.mxu0 %v1061
    %1588 = vmatmul.mubr.bf16.gmra.mxu0 %v1060
    %v1589 = vpop.f32.mrf.mxu0
    %v1590 = vadd.f32 %v1233, %v1589
    %v1591 = vpop.f32.mrf.mxu0
    %v1592 = vpop.f32.mrf.mxu0
    %v1593 = vadd.f32 %v1233, %v1592
    %v1594 = vpop.f32.mrf.mxu0
    %1595 = vmatprep.mubr.bf16.mxu0 %v1067
    %1596 = vmatmul.mubr.bf16.gmra.mxu0 %v1066
    %v1597 = vpop.f32.mrf.mxu0
    %v1598 = vadd.f32 %v1233, %v1597
    %v1599 = vpop.f32.mrf.mxu0
    %v1600 = vpop.f32.mrf.mxu0
    %v1601 = vadd.f32 %v1233, %v1600
    %v1602 = vpop.f32.mrf.mxu0
    %1603 = vmatprep.mubr.bf16.mxu0 %v1073
    %1604 = vmatmul.mubr.bf16.gmra.mxu0 %v1072
    %v1605 = vpop.f32.mrf.mxu0
    %v1606 = vadd.f32 %v1233, %v1605
    %v1607 = vpop.f32.mrf.mxu0
    %v1608 = vpop.f32.mrf.mxu0
    %v1609 = vadd.f32 %v1233, %v1608
    %v1610 = vpop.f32.mrf.mxu0
    %1611 = vmatprep.mubr.bf16.mxu0 %v1079
    %1612 = vmatmul.mubr.bf16.gmra.mxu0 %v1078
    %v1613 = vpop.f32.mrf.mxu0
    %v1614 = vadd.f32 %v1233, %v1613
    %v1615 = vpop.f32.mrf.mxu0
    %v1616 = vpop.f32.mrf.mxu0
    %v1617 = vadd.f32 %v1233, %v1616
    %v1618 = vpop.f32.mrf.mxu0
    %1619 = vmatprep.mubr.bf16.mxu0 %v1085
    %1620 = vmatmul.mubr.bf16.gmra.mxu0 %v1084
    %v1621 = vpop.f32.mrf.mxu0
    %v1622 = vadd.f32 %v1233, %v1621
    %v1623 = vpop.f32.mrf.mxu0
    %v1624 = vpop.f32.mrf.mxu0
    %v1625 = vadd.f32 %v1233, %v1624
    %v1626 = vpop.f32.mrf.mxu0
    %1627 = vmatprep.mubr.bf16.mxu0 %v1091
    %1628 = vmatmul.mubr.bf16.gmra.mxu0 %v1090
    %v1629 = vpop.f32.mrf.mxu0
    %v1630 = vadd.f32 %v1233, %v1629
    %v1631 = vpop.f32.mrf.mxu0
    %v1632 = vpop.f32.mrf.mxu0
    %v1633 = vadd.f32 %v1233, %v1632
    %v1634 = vpop.f32.mrf.mxu0
    %1635 = vmatprep.mubr.bf16.mxu0 %v1097
    %1636 = vmatmul.mubr.bf16.gmra.mxu0 %v1096
    %v1637 = vpop.f32.mrf.mxu0
    %v1638 = vadd.f32 %v1233, %v1637
    %v1639 = vpop.f32.mrf.mxu0
    %v1640 = vpop.f32.mrf.mxu0
    %v1641 = vadd.f32 %v1233, %v1640
    %v1642 = vpop.f32.mrf.mxu0
    %1643 = vmatprep.mubr.bf16.mxu0 %v1103
    %1644 = vmatmul.mubr.bf16.gmra.mxu0 %v1102
    %v1645 = vpop.f32.mrf.mxu0
    %v1646 = vadd.f32 %v1233, %v1645
    %v1647 = vpop.f32.mrf.mxu0
    %v1648 = vpop.f32.mrf.mxu0
    %v1649 = vadd.f32 %v1233, %v1648
    %v1650 = vpop.f32.mrf.mxu0
    %1651 = vmatprep.mubr.bf16.mxu0 %v1109
    %1652 = vmatmul.mubr.bf16.gmra.mxu0 %v1108
    %v1653 = vpop.f32.mrf.mxu0
    %v1654 = vadd.f32 %v1233, %v1653
    %v1655 = vpop.f32.mrf.mxu0
    %v1656 = vpop.f32.mrf.mxu0
    %v1657 = vadd.f32 %v1233, %v1656
    %v1658 = vpop.f32.mrf.mxu0
    %1659 = vmatprep.mubr.bf16.mxu0 %v1115
    %1660 = vmatmul.mubr.bf16.gmra.mxu0 %v1114
    %v1661 = vpop.f32.mrf.mxu0
    %v1662 = vadd.f32 %v1233, %v1661
    %v1663 = vpop.f32.mrf.mxu0
    %v1664 = vpop.f32.mrf.mxu0
    %v1665 = vadd.f32 %v1233, %v1664
    %v1666 = vpop.f32.mrf.mxu0
    %1667 = vmatprep.mubr.bf16.mxu0 %v1121
    %1668 = vmatmul.mubr.bf16.gmra.mxu0 %v1120
    %v1669 = vpop.f32.mrf.mxu0
    %v1670 = vadd.f32 %v1233, %v1669
    %v1671 = vpop.f32.mrf.mxu0
    %v1672 = vpop.f32.mrf.mxu0
    %v1673 = vadd.f32 %v1233, %v1672
    %v1674 = vpop.f32.mrf.mxu0
    %1675 = vmatprep.mubr.bf16.mxu0 %v1127
    %1676 = vmatmul.mubr.bf16.gmra.mxu0 %v1126
    %v1677 = vpop.f32.mrf.mxu0
    %v1678 = vadd.f32 %v1233, %v1677
    %v1679 = vpop.f32.mrf.mxu0
    %v1680 = vpop.f32.mrf.mxu0
    %v1681 = vadd.f32 %v1233, %v1680
    %v1682 = vpop.f32.mrf.mxu0
    %1683 = vdwg.mxu0
    %1684 = vmatprep.subr.bf16.mxu0 0
    %1685 = vmatpush1.bf16.msra.mxu0 %v1450
    %1686 = vmatprep.subr.bf16.mxu0 0
    %1687 = vmatpush1.bf16.msra.mxu0 %v1449
    %1688 = vmatprep.subr.bf16.mxu0 0
    %1689 = vmatpush1.bf16.msra.mxu0 %v1448
    %1690 = vmatprep.subr.bf16.mxu0 0
    %1691 = vmatpush1.bf16.msra.mxu0 %v1447
    %1692 = vmatprep.subr.bf16.mxu0 0
    %1693 = vmatpush1.bf16.msra.mxu0 %v1446
    %1694 = vmatprep.subr.bf16.mxu0 0
    %1695 = vmatpush1.bf16.msra.mxu0 %v1445
    %1696 = vmatprep.subr.bf16.mxu0 0
    %1697 = vmatpush1.bf16.msra.mxu0 %v1444
    %1698 = vmatprep.subr.bf16.mxu0 0
    %1699 = vmatpush1.bf16.msra.mxu0 %v1443
    %1700 = vmatprep.subr.bf16.mxu0 0
    %1701 = vmatpush2.bf16.msra.mxu0 %v1458
    %1702 = vmatprep.subr.bf16.mxu0 0
    %1703 = vmatpush2.bf16.msra.mxu0 %v1457
    %1704 = vmatprep.subr.bf16.mxu0 0
    %1705 = vmatpush2.bf16.msra.mxu0 %v1456
    %1706 = vmatprep.subr.bf16.mxu0 0
    %1707 = vmatpush2.bf16.msra.mxu0 %v1455
    %1708 = vmatprep.subr.bf16.mxu0 0
    %1709 = vmatpush2.bf16.msra.mxu0 %v1454
    %1710 = vmatprep.subr.bf16.mxu0 0
    %1711 = vmatpush2.bf16.msra.mxu0 %v1453
    %1712 = vmatprep.subr.bf16.mxu0 0
    %1713 = vmatpush2.bf16.msra.mxu0 %v1452
    %1714 = vmatprep.subr.bf16.mxu0 0
    %1715 = vmatpush2.bf16.msra.mxu0 %v1451
    %1716 = vmatprep.mubr.bf16.mxu0 %v1039
    %1717 = vmatmul.mubr.bf16.gmra.mxu0 %v1038
    %v1718 = vpop.f32.mrf.mxu0
    %v1719 = vadd.f32 %v1558, %v1718
    %v1720 = vpop.f32.mrf.mxu0
    %v1721 = vpop.f32.mrf.mxu0
    %v1722 = vadd.f32 %v1561, %v1721
    %v1723 = vpop.f32.mrf.mxu0
    %1724 = vmatprep.mubr.bf16.mxu0 %v1045
    %1725 = vmatmul.mubr.bf16.gmra.mxu0 %v1044
    %v1726 = vpop.f32.mrf.mxu0
    %v1727 = vadd.f32 %v1566, %v1726
    %v1728 = vpop.f32.mrf.mxu0
    %v1729 = vpop.f32.mrf.mxu0
    %v1730 = vadd.f32 %v1569, %v1729
    %v1731 = vpop.f32.mrf.mxu0
    %1732 = vmatprep.mubr.bf16.mxu0 %v1051
    %1733 = vmatmul.mubr.bf16.gmra.mxu0 %v1050
    %v1734 = vpop.f32.mrf.mxu0
    %v1735 = vadd.f32 %v1574, %v1734
    %v1736 = vpop.f32.mrf.mxu0
    %v1737 = vpop.f32.mrf.mxu0
    %v1738 = vadd.f32 %v1577, %v1737
    %v1739 = vpop.f32.mrf.mxu0
    %1740 = vmatprep.mubr.bf16.mxu0 %v1057
    %1741 = vmatmul.mubr.bf16.gmra.mxu0 %v1056
    %v1742 = vpop.f32.mrf.mxu0
    %v1743 = vadd.f32 %v1582, %v1742
    %v1744 = vpop.f32.mrf.mxu0
    %v1745 = vpop.f32.mrf.mxu0
    %v1746 = vadd.f32 %v1585, %v1745
    %v1747 = vpop.f32.mrf.mxu0
    %1748 = vmatprep.mubr.bf16.mxu0 %v1063
    %1749 = vmatmul.mubr.bf16.gmra.mxu0 %v1062
    %v1750 = vpop.f32.mrf.mxu0
    %v1751 = vadd.f32 %v1590, %v1750
    %v1752 = vpop.f32.mrf.mxu0
    %v1753 = vpop.f32.mrf.mxu0
    %v1754 = vadd.f32 %v1593, %v1753
    %v1755 = vpop.f32.mrf.mxu0
    %1756 = vmatprep.mubr.bf16.mxu0 %v1069
    %1757 = vmatmul.mubr.bf16.gmra.mxu0 %v1068
    %v1758 = vpop.f32.mrf.mxu0
    %v1759 = vadd.f32 %v1598, %v1758
    %v1760 = vpop.f32.mrf.mxu0
    %v1761 = vpop.f32.mrf.mxu0
    %v1762 = vadd.f32 %v1601, %v1761
    %v1763 = vpop.f32.mrf.mxu0
    %1764 = vmatprep.mubr.bf16.mxu0 %v1075
    %1765 = vmatmul.mubr.bf16.gmra.mxu0 %v1074
    %v1766 = vpop.f32.mrf.mxu0
    %v1767 = vadd.f32 %v1606, %v1766
    %v1768 = vpop.f32.mrf.mxu0
    %v1769 = vpop.f32.mrf.mxu0
    %v1770 = vadd.f32 %v1609, %v1769
    %v1771 = vpop.f32.mrf.mxu0
    %1772 = vmatprep.mubr.bf16.mxu0 %v1081
    %1773 = vmatmul.mubr.bf16.gmra.mxu0 %v1080
    %v1774 = vpop.f32.mrf.mxu0
    %v1775 = vadd.f32 %v1614, %v1774
    %v1776 = vpop.f32.mrf.mxu0
    %v1777 = vpop.f32.mrf.mxu0
    %v1778 = vadd.f32 %v1617, %v1777
    %v1779 = vpop.f32.mrf.mxu0
    %1780 = vmatprep.mubr.bf16.mxu0 %v1087
    %1781 = vmatmul.mubr.bf16.gmra.mxu0 %v1086
    %v1782 = vpop.f32.mrf.mxu0
    %v1783 = vadd.f32 %v1622, %v1782
    %v1784 = vpop.f32.mrf.mxu0
    %v1785 = vpop.f32.mrf.mxu0
    %v1786 = vadd.f32 %v1625, %v1785
    %v1787 = vpop.f32.mrf.mxu0
    %1788 = vmatprep.mubr.bf16.mxu0 %v1093
    %1789 = vmatmul.mubr.bf16.gmra.mxu0 %v1092
    %v1790 = vpop.f32.mrf.mxu0
    %v1791 = vadd.f32 %v1630, %v1790
    %v1792 = vpop.f32.mrf.mxu0
    %v1793 = vpop.f32.mrf.mxu0
    %v1794 = vadd.f32 %v1633, %v1793
    %v1795 = vpop.f32.mrf.mxu0
    %1796 = vmatprep.mubr.bf16.mxu0 %v1099
    %1797 = vmatmul.mubr.bf16.gmra.mxu0 %v1098
    %v1798 = vpop.f32.mrf.mxu0
    %v1799 = vadd.f32 %v1638, %v1798
    %v1800 = vpop.f32.mrf.mxu0
    %v1801 = vpop.f32.mrf.mxu0
    %v1802 = vadd.f32 %v1641, %v1801
    %v1803 = vpop.f32.mrf.mxu0
    %1804 = vmatprep.mubr.bf16.mxu0 %v1105
    %1805 = vmatmul.mubr.bf16.gmra.mxu0 %v1104
    %v1806 = vpop.f32.mrf.mxu0
    %v1807 = vadd.f32 %v1646, %v1806
    %v1808 = vpop.f32.mrf.mxu0
    %v1809 = vpop.f32.mrf.mxu0
    %v1810 = vadd.f32 %v1649, %v1809
    %v1811 = vpop.f32.mrf.mxu0
    %1812 = vmatprep.mubr.bf16.mxu0 %v1111
    %1813 = vmatmul.mubr.bf16.gmra.mxu0 %v1110
    %v1814 = vpop.f32.mrf.mxu0
    %v1815 = vadd.f32 %v1654, %v1814
    %v1816 = vpop.f32.mrf.mxu0
    %v1817 = vpop.f32.mrf.mxu0
    %v1818 = vadd.f32 %v1657, %v1817
    %v1819 = vpop.f32.mrf.mxu0
    %1820 = vmatprep.mubr.bf16.mxu0 %v1117
    %1821 = vmatmul.mubr.bf16.gmra.mxu0 %v1116
    %v1822 = vpop.f32.mrf.mxu0
    %v1823 = vadd.f32 %v1662, %v1822
    %v1824 = vpop.f32.mrf.mxu0
    %v1825 = vpop.f32.mrf.mxu0
    %v1826 = vadd.f32 %v1665, %v1825
    %v1827 = vpop.f32.mrf.mxu0
    %1828 = vmatprep.mubr.bf16.mxu0 %v1123
    %1829 = vmatmul.mubr.bf16.gmra.mxu0 %v1122
    %v1830 = vpop.f32.mrf.mxu0
    %v1831 = vadd.f32 %v1670, %v1830
    %v1832 = vpop.f32.mrf.mxu0
    %v1833 = vpop.f32.mrf.mxu0
    %v1834 = vadd.f32 %v1673, %v1833
    %v1835 = vpop.f32.mrf.mxu0
    %1836 = vmatprep.mubr.bf16.mxu0 %v1129
    %1837 = vmatmul.mubr.bf16.gmra.mxu0 %v1128
    %v1838 = vpop.f32.mrf.mxu0
    %v1839 = vadd.f32 %v1678, %v1838
    %v1840 = vpop.f32.mrf.mxu0
    %v1841 = vpop.f32.mrf.mxu0
    %v1842 = vadd.f32 %v1681, %v1841
    %v1843 = vpop.f32.mrf.mxu0
    %1844 = vdwg.mxu0
    %1845 = vmatprep.subr.bf16.mxu0 0
    %1846 = vmatpush1.bf16.msra.mxu0 %v1466
    %1847 = vmatprep.subr.bf16.mxu0 0
    %1848 = vmatpush1.bf16.msra.mxu0 %v1465
    %1849 = vmatprep.subr.bf16.mxu0 0
    %1850 = vmatpush1.bf16.msra.mxu0 %v1464
    %1851 = vmatprep.subr.bf16.mxu0 0
    %1852 = vmatpush1.bf16.msra.mxu0 %v1463
    %1853 = vmatprep.subr.bf16.mxu0 0
    %1854 = vmatpush1.bf16.msra.mxu0 %v1462
    %1855 = vmatprep.subr.bf16.mxu0 0
    %1856 = vmatpush1.bf16.msra.mxu0 %v1461
    %1857 = vmatprep.subr.bf16.mxu0 0
    %1858 = vmatpush1.bf16.msra.mxu0 %v1460
    %1859 = vmatprep.subr.bf16.mxu0 0
    %1860 = vmatpush1.bf16.msra.mxu0 %v1459
    %1861 = vmatprep.subr.bf16.mxu0 0
    %1862 = vmatpush2.bf16.msra.mxu0 %v1474
    %1863 = vmatprep.subr.bf16.mxu0 0
    %1864 = vmatpush2.bf16.msra.mxu0 %v1473
    %1865 = vmatprep.subr.bf16.mxu0 0
    %1866 = vmatpush2.bf16.msra.mxu0 %v1472
    %1867 = vmatprep.subr.bf16.mxu0 0
    %1868 = vmatpush2.bf16.msra.mxu0 %v1471
    %1869 = vmatprep.subr.bf16.mxu0 0
    %1870 = vmatpush2.bf16.msra.mxu0 %v1470
    %1871 = vmatprep.subr.bf16.mxu0 0
    %1872 = vmatpush2.bf16.msra.mxu0 %v1469
    %1873 = vmatprep.subr.bf16.mxu0 0
    %1874 = vmatpush2.bf16.msra.mxu0 %v1468
    %1875 = vmatprep.subr.bf16.mxu0 0
    %1876 = vmatpush2.bf16.msra.mxu0 %v1467
    %1877 = vmatprep.mubr.bf16.mxu0 %v1041
    %1878 = vmatmul.mubr.bf16.gmra.mxu0 %v1040
    %v1879 = vpop.f32.mrf.mxu0
    %v1880 = vadd.f32 %v1719, %v1879
    %v1881 = vpop.f32.mrf.mxu0
    %v1882 = vpop.f32.mrf.mxu0
    %v1883 = vadd.f32 %v1722, %v1882
    %v1884 = vpop.f32.mrf.mxu0
    %1885 = vmatprep.mubr.bf16.mxu0 %v1047
    %1886 = vmatmul.mubr.bf16.gmra.mxu0 %v1046
    %v1887 = vpop.f32.mrf.mxu0
    %v1888 = vadd.f32 %v1727, %v1887
    %v1889 = vpop.f32.mrf.mxu0
    %v1890 = vpop.f32.mrf.mxu0
    %v1891 = vadd.f32 %v1730, %v1890
    %v1892 = vpop.f32.mrf.mxu0
    %1893 = vmatprep.mubr.bf16.mxu0 %v1053
    %1894 = vmatmul.mubr.bf16.gmra.mxu0 %v1052
    %v1895 = vpop.f32.mrf.mxu0
    %v1896 = vadd.f32 %v1735, %v1895
    %v1897 = vpop.f32.mrf.mxu0
    %v1898 = vpop.f32.mrf.mxu0
    %v1899 = vadd.f32 %v1738, %v1898
    %v1900 = vpop.f32.mrf.mxu0
    %1901 = vmatprep.mubr.bf16.mxu0 %v1059
    %1902 = vmatmul.mubr.bf16.gmra.mxu0 %v1058
    %v1903 = vpop.f32.mrf.mxu0
    %v1904 = vadd.f32 %v1743, %v1903
    %v1905 = vpop.f32.mrf.mxu0
    %v1906 = vpop.f32.mrf.mxu0
    %v1907 = vadd.f32 %v1746, %v1906
    %v1908 = vpop.f32.mrf.mxu0
    %1909 = vmatprep.mubr.bf16.mxu0 %v1065
    %1910 = vmatmul.mubr.bf16.gmra.mxu0 %v1064
    %v1911 = vpop.f32.mrf.mxu0
    %v1912 = vadd.f32 %v1751, %v1911
    %v1913 = vpop.f32.mrf.mxu0
    %v1914 = vpop.f32.mrf.mxu0
    %v1915 = vadd.f32 %v1754, %v1914
    %v1916 = vpop.f32.mrf.mxu0
    %1917 = vmatprep.mubr.bf16.mxu0 %v1071
    %1918 = vmatmul.mubr.bf16.gmra.mxu0 %v1070
    %v1919 = vpop.f32.mrf.mxu0
    %v1920 = vadd.f32 %v1759, %v1919
    %v1921 = vpop.f32.mrf.mxu0
    %v1922 = vpop.f32.mrf.mxu0
    %v1923 = vadd.f32 %v1762, %v1922
    %v1924 = vpop.f32.mrf.mxu0
    %1925 = vmatprep.mubr.bf16.mxu0 %v1077
    %1926 = vmatmul.mubr.bf16.gmra.mxu0 %v1076
    %v1927 = vpop.f32.mrf.mxu0
    %v1928 = vadd.f32 %v1767, %v1927
    %v1929 = vpop.f32.mrf.mxu0
    %v1930 = vpop.f32.mrf.mxu0
    %v1931 = vadd.f32 %v1770, %v1930
    %v1932 = vpop.f32.mrf.mxu0
    %1933 = vmatprep.mubr.bf16.mxu0 %v1083
    %1934 = vmatmul.mubr.bf16.gmra.mxu0 %v1082
    %v1935 = vpop.f32.mrf.mxu0
    %v1936 = vadd.f32 %v1775, %v1935
    %v1937 = vpop.f32.mrf.mxu0
    %v1938 = vpop.f32.mrf.mxu0
    %v1939 = vadd.f32 %v1778, %v1938
    %v1940 = vpop.f32.mrf.mxu0
    %1941 = vmatprep.mubr.bf16.mxu0 %v1089
    %1942 = vmatmul.mubr.bf16.gmra.mxu0 %v1088
    %v1943 = vpop.f32.mrf.mxu0
    %v1944 = vadd.f32 %v1783, %v1943
    %v1945 = vpop.f32.mrf.mxu0
    %v1946 = vpop.f32.mrf.mxu0
    %v1947 = vadd.f32 %v1786, %v1946
    %v1948 = vpop.f32.mrf.mxu0
    %1949 = vmatprep.mubr.bf16.mxu0 %v1095
    %1950 = vmatmul.mubr.bf16.gmra.mxu0 %v1094
    %v1951 = vpop.f32.mrf.mxu0
    %v1952 = vadd.f32 %v1791, %v1951
    %v1953 = vpop.f32.mrf.mxu0
    %v1954 = vpop.f32.mrf.mxu0
    %v1955 = vadd.f32 %v1794, %v1954
    %v1956 = vpop.f32.mrf.mxu0
    %1957 = vmatprep.mubr.bf16.mxu0 %v1101
    %1958 = vmatmul.mubr.bf16.gmra.mxu0 %v1100
    %v1959 = vpop.f32.mrf.mxu0
    %v1960 = vadd.f32 %v1799, %v1959
    %v1961 = vpop.f32.mrf.mxu0
    %v1962 = vpop.f32.mrf.mxu0
    %v1963 = vadd.f32 %v1802, %v1962
    %v1964 = vpop.f32.mrf.mxu0
    %1965 = vmatprep.mubr.bf16.mxu0 %v1107
    %1966 = vmatmul.mubr.bf16.gmra.mxu0 %v1106
    %v1967 = vpop.f32.mrf.mxu0
    %v1968 = vadd.f32 %v1807, %v1967
    %v1969 = vpop.f32.mrf.mxu0
    %v1970 = vpop.f32.mrf.mxu0
    %v1971 = vadd.f32 %v1810, %v1970
    %v1972 = vpop.f32.mrf.mxu0
    %1973 = vmatprep.mubr.bf16.mxu0 %v1113
    %1974 = vmatmul.mubr.bf16.gmra.mxu0 %v1112
    %v1975 = vpop.f32.mrf.mxu0
    %v1976 = vadd.f32 %v1815, %v1975
    %v1977 = vpop.f32.mrf.mxu0
    %v1978 = vpop.f32.mrf.mxu0
    %v1979 = vadd.f32 %v1818, %v1978
    %v1980 = vpop.f32.mrf.mxu0
    %1981 = vmatprep.mubr.bf16.mxu0 %v1119
    %1982 = vmatmul.mubr.bf16.gmra.mxu0 %v1118
    %v1983 = vpop.f32.mrf.mxu0
    %v1984 = vadd.f32 %v1823, %v1983
    %v1985 = vpop.f32.mrf.mxu0
    %v1986 = vpop.f32.mrf.mxu0
    %v1987 = vadd.f32 %v1826, %v1986
    %v1988 = vpop.f32.mrf.mxu0
    %1989 = vmatprep.mubr.bf16.mxu0 %v1125
    %1990 = vmatmul.mubr.bf16.gmra.mxu0 %v1124
    %v1991 = vpop.f32.mrf.mxu0
    %v1992 = vadd.f32 %v1831, %v1991
    %v1993 = vpop.f32.mrf.mxu0
    %v1994 = vpop.f32.mrf.mxu0
    %v1995 = vadd.f32 %v1834, %v1994
    %v1996 = vpop.f32.mrf.mxu0
    %1997 = vmatprep.mubr.bf16.mxu0 %v1131
    %1998 = vmatmul.mubr.bf16.gmra.mxu0 %v1130
    %v1999 = vpop.f32.mrf.mxu0
    %v2000 = vadd.f32 %v1839, %v1999
    %v2001 = vpop.f32.mrf.mxu0
    %v2002 = vpop.f32.mrf.mxu0
    %v2003 = vadd.f32 %v1842, %v2002
    %v2004 = vpop.f32.mrf.mxu0
    %2005 = vdwg.mxu0
    %2006 = vst [vmem:[%s5] sm:$0xff] %v1880
    %2007 = vst [vmem:[%s5 + $0x8] sm:$0xff] %v1883
    %2008 = vst [vmem:[%s5 + $0x10] sm:$0xff] %v1888
    %2009 = vst [vmem:[%s5 + $0x18] sm:$0xff] %v1891
    %2010 = vst [vmem:[%s5 + $0x20] sm:$0xff] %v1896
    %2011 = vst [vmem:[%s5 + $0x28] sm:$0xff] %v1899
    %2012 = vst [vmem:[%s5 + $0x30] sm:$0xff] %v1904
    %2013 = vst [vmem:[%s5 + $0x38] sm:$0xff] %v1907
    %2014 = vst [vmem:[%s5 + $0x40] sm:$0xff] %v1912
    %2015 = vst [vmem:[%s5 + $0x48] sm:$0xff] %v1915
    %2016 = vst [vmem:[%s5 + $0x50] sm:$0xff] %v1920
    %2017 = vst [vmem:[%s5 + $0x58] sm:$0xff] %v1923
    %2018 = vst [vmem:[%s5 + $0x60] sm:$0xff] %v1928
    %2019 = vst [vmem:[%s5 + $0x68] sm:$0xff] %v1931
    %2020 = vst [vmem:[%s5 + $0x70] sm:$0xff] %v1936
    %2021 = vst [vmem:[%s5 + $0x78] sm:$0xff] %v1939
    %2022 = vst [vmem:[%s5 + $0x80] sm:$0xff] %v1944
    %2023 = vst [vmem:[%s5 + $0x88] sm:$0xff] %v1947
    %2024 = vst [vmem:[%s5 + $0x90] sm:$0xff] %v1952
    %2025 = vst [vmem:[%s5 + $0x98] sm:$0xff] %v1955
    %2026 = vst [vmem:[%s5 + $0xa0] sm:$0xff] %v1960
    %2027 = vst [vmem:[%s5 + $0xa8] sm:$0xff] %v1963
    %2028 = vst [vmem:[%s5 + $0xb0] sm:$0xff] %v1968
    %2029 = vst [vmem:[%s5 + $0xb8] sm:$0xff] %v1971
    %2030 = vst [vmem:[%s5 + $0xc0] sm:$0xff] %v1976
    %2031 = vst [vmem:[%s5 + $0xc8] sm:$0xff] %v1979
    %2032 = vst [vmem:[%s5 + $0xd0] sm:$0xff] %v1984
    %2033 = vst [vmem:[%s5 + $0xd8] sm:$0xff] %v1987
    %2034 = vst [vmem:[%s5 + $0xe0] sm:$0xff] %v1992
    %2035 = vst [vmem:[%s5 + $0xe8] sm:$0xff] %v1995
    %2036 = vst [vmem:[%s5 + $0xf0] sm:$0xff] %v2000
    %2037 = vst [vmem:[%s5 + $0xf8] sm:$0xff] %v2003
    // Predicated region
    $region26: #{net_forward.1} parent=1 // pred_check
      _
    $region27: #{net_forward.1} parent=1 // pred_check_branch
      %2039 = sbr.rel (0) target = $region29
    $region28: #{net_forward.1} parent=1 // pred_region
      _
    $region29: #{net_forward.1} parent=1 // pred_fallthru
      _
    // Predicated region
    $region30: #{net_forward.1} parent=1 // pred_check
      _
    $region31: #{net_forward.1} parent=1 // pred_check_branch
      %2041 = sbr.rel (0) target = $region33
    $region32: #{net_forward.1} parent=1 // pred_region
      _
    $region33: #{net_forward.1} parent=1 // pred_fallthru
      _
    %2042 = vsyncpa [#allocation3], 1

</llo_original>
